<compile_context>
chip_gen: v7x
topology: tpu7x:2x2x1
jax: 0.10.0
libtpu: 0.0.40
codegen_flags: <defaults>
</compile_context>

<pallas_src>
import jax
import jax.numpy as jnp
from jax.experimental import pallas as pl
from jax.experimental.pallas import tpu as pltpu

LANE = 128


def _make_conv_kernel(KH, KW, fold):
    """Builds the kernel body for one (batch, output-row-slab) grid step."""

    def kernel(x_ref, w_ref, o_ref):
        # x_ref: (1, Hp, Wp, Cin)                zero-padded image      (bf16)
        # w_ref: fold  -> (KH*KW*Cin, Cout_blk)  folded weights         (bf16)
        #        !fold -> (KH, KW, Cin, Cout_blk) HWIO weights          (bf16)
        # o_ref: (1, TH, W, Cout_blk)            output row slab        (bf16)
        TH, W, Cout_blk = o_ref.shape[1], o_ref.shape[2], o_ref.shape[3]
        Cin = x_ref.shape[3]

        r = pl.program_id(1)
        row0 = pl.multiple_of(r * TH, TH)   # first output row of this slab

        def tap(kh, kw):
            # Shifted (TH, W, Cin) window of the padded image, flattened so the
            # MXU sees M = TH*W (slab-level matmul) instead of M = W.
            win = x_ref[0, pl.ds(row0 + kh, TH), kw:kw + W, :]
            return win.reshape(TH * W, Cin)

        if fold:
            # im2col over all taps: one MXU contraction with K = KH*KW*Cin.
            lhs = jnp.concatenate(
                [tap(kh, kw) for kh in range(KH) for kw in range(KW)],
                axis=-1)
            acc = jnp.dot(lhs, w_ref[...], preferred_element_type=jnp.float32)
        else:
            # Per-tap slab matmuls: weight tile loaded inside the loop (no big
            # hoisted live set); acc initialised from the first tap.
            acc = jnp.dot(tap(0, 0), w_ref[0, 0],
                          preferred_element_type=jnp.float32)
            for kh in range(KH):
                for kw in range(KW):
                    if kh == 0 and kw == 0:
                        continue
                    acc += jnp.dot(tap(kh, kw), w_ref[kh, kw],
                                   preferred_element_type=jnp.float32)

        # activation = nn.Identity() -> no-op.  Store bf16; f32 only for acc.
        o_ref[0, :, :, :] = acc.reshape(TH, W, Cout_blk).astype(o_ref.dtype)

    return kernel


def conv_forward(x_nchw, w_oihw, *, compute_dtype=jnp.bfloat16):
    """Equivalent of Conv(in_c, out_c, k, bias=False).forward(x) (defaults)."""
    N, Cin, H, W = x_nchw.shape
    Cout, Cin_w, KH, KW = w_oihw.shape
    assert Cin == Cin_w, "groups != 1 not supported"
    assert KH % 2 == 1 and KW % 2 == 1, "even kernel sizes not supported"
    ph, pw = (KH - 1) // 2, (KW - 1) // 2
    Wp = W + KW - 1

    # Output-channel blocking: lane-pad only when it does not amplify HBM
    # writeback badly (tiny Cout padded to 128 would be 16x write traffic).
    if Cout % LANE == 0 or Cout <= LANE:
        Cout_blk = Cout                       # masked vst for tiny Cout is ok
    else:
        Cout_blk = ((Cout + LANE - 1) // LANE) * LANE   # lane-dense, <2x pad

    # Row-slab size: target MXU M = TH*W ~ 512; pad H up so awkward H never
    # falls back to per-row grid steps.
    TH = max(1, min(H, pl.cdiv(512, W)))
    H_pad = pl.cdiv(H, TH) * TH
    Hp = H_pad + KH - 1

    # Tap folding (im2col on K) for thin-channel convs.
    Kfold = KH * KW * Cin
    fold = Kfold <= 256

    # Layout glue (XLA): NCHW->NHWC, spatial zero-pad (+ bottom overhang rows
    # for H_pad), bf16 cast for the MXU.  See TODO(synk) in the header.
    x = jnp.transpose(x_nchw, (0, 2, 3, 1)).astype(compute_dtype)
    x = jnp.pad(x, ((0, 0), (ph, ph + (H_pad - H)), (pw, pw), (0, 0)))

    w = jnp.transpose(w_oihw, (2, 3, 1, 0)).astype(compute_dtype)    # HWIO
    if Cout_blk != Cout:
        w = jnp.pad(w, ((0, 0), (0, 0), (0, 0), (0, Cout_blk - Cout)))
    if fold:
        w = w.reshape(Kfold, Cout_blk)
        w_spec = pl.BlockSpec((Kfold, Cout_blk), lambda n, r: (0, 0),
                              pipeline_mode=pl.Buffered(1))
    else:
        w_spec = pl.BlockSpec((KH, KW, Cin, Cout_blk),
                              lambda n, r: (0, 0, 0, 0),
                              pipeline_mode=pl.Buffered(1))

    grid = (N, H_pad // TH)

    # VMEM budget from actual block sizes (input + weights single-buffered,
    # output slab double-buffered, margin for f32 acc / folded LHS), clamped
    # to <=48 MiB so v7x (64 MiB/TC) keeps compiler headroom.
    need = (Hp * Wp * Cin * 2 + Kfold * Cout_blk * 2
            + 2 * TH * W * Cout_blk * 2
            + TH * W * (Kfold + 4 * Cout_blk) * 4)
    vmem_limit = int(min(max(2 * need, 32 << 20), 48 << 20))

    out_nhwc = pl.pallas_call(
        _make_conv_kernel(KH, KW, fold),
        out_shape=jax.ShapeDtypeStruct((N, H_pad, W, Cout_blk), compute_dtype),
        grid_spec=pltpu.PrefetchScalarGridSpec(
            num_scalar_prefetch=0,
            grid=grid,
            in_specs=[
                # Whole padded image of batch n; block index constant in r and
                # single-buffered -> held once in VMEM, re-DMAed only when n
                # changes.
                pl.BlockSpec((1, Hp, Wp, Cin), lambda n, r: (n, 0, 0, 0),
                             pipeline_mode=pl.Buffered(1)),
                # Full weights; block index never changes -> fetched once,
                # single-buffered.
                w_spec,
            ],
            out_specs=pl.BlockSpec((1, TH, W, Cout_blk),
                                   lambda n, r: (n, r, 0, 0)),
        ),
        compiler_params=pltpu.CompilerParams(
            # Independent output slabs -> shardable across v7x's two TCs.
            dimension_semantics=("parallel", "parallel"),
            vmem_limit_bytes=vmem_limit,
        ),
    )(x, w)

    out = out_nhwc[:, :H, :, :Cout]            # drop H overhang / Cout pad
    return jnp.transpose(out, (0, 3, 1, 2)).astype(x_nchw.dtype)    # -> NCHW


if __name__ == "__main__":
    # Small shapes consistent with the module: Conv(4, 8, kernel_size=3)
    N, Cin, H, W = 2, 4, 16, 16
    Cout, K = 8, 3

    key = jax.random.PRNGKey(0)
    kx, kw_key = jax.random.split(key)
    x = jax.random.normal(kx, (N, Cin, H, W), dtype=jnp.float32)
    # Deterministic kaiming-uniform-style init for Conv2d weight (OIHW)
    fan_in = Cin * K * K
    bound = 1.0 / jnp.sqrt(fan_in)
    w = jax.random.uniform(kw_key, (Cout, Cin, K, K), dtype=jnp.float32,
                           minval=-bound, maxval=bound)

    out = conv_forward(x, w)
    jax.block_until_ready(out)

    # Reference: XLA conv with identical bf16-cast inputs and f32 accumulation
    # (same semantics as nn.Conv2d(padding=(k-1)//2, bias=False)).
    ref = jax.lax.conv_general_dilated(
        x.astype(jnp.bfloat16), w.astype(jnp.bfloat16),
        window_strides=(1, 1), padding=((1, 1), (1, 1)),
        dimension_numbers=("NCHW", "OIHW", "NCHW"),
        preferred_element_type=jnp.float32)

    assert out.shape == (N, Cout, H, W)
    assert jnp.allclose(out, ref, atol=2e-2, rtol=2e-2), \
        float(jnp.max(jnp.abs(out - ref)))

    print("KERNEL_OK")
</pallas_src>

<mosaic_0001>
module attributes {stable_mosaic.version = 11 : i64} {
  func.func @kernel(%arg0: i32, %arg1: i32, %arg2: memref<1x18x18x4xbf16, #tpu.memory_space<vmem>>, %arg3: memref<36x8xbf16, #tpu.memory_space<vmem>>, %arg4: memref<1x16x16x8xbf16, #tpu.memory_space<vmem>>) attributes {dimension_semantics = [#tpu.dimension_semantics<parallel>, #tpu.dimension_semantics<parallel>], iteration_bounds = array<i64: 2, 1>, scalar_prefetch = 0 : i64, scratch_operands = 0 : i64, tpu.core_type = #tpu.core_type<tc>, window_params = [{pipeline_mode = #tpu.pipeline_mode<synchronous>, transform_indices = @transform_0, window_bounds = array<i64: 1, 18, 18, 4>}, {pipeline_mode = #tpu.pipeline_mode<synchronous>, transform_indices = @transform_1, window_bounds = array<i64: 36, 8>}, {transform_indices = @transform_2, window_bounds = array<i64: 1, 16, 16, 8>}]} {
    %c16_i32 = arith.constant 16 : i32
    %0 = arith.muli %arg1, %c16_i32 : i32
    %1 = tpu.assume_multiple %0, 16 : i32
    %c0_i32 = arith.constant 0 : i32
    %2 = arith.addi %1, %c0_i32 : i32
    %c0 = arith.constant 0 : index
    %3 = arith.index_cast %2 : i32 to index
    %c0_0 = arith.constant 0 : index
    %c0_1 = arith.constant 0 : index
    %4 = vector.load %arg2[%c0, %3, %c0_0, %c0_1] : memref<1x18x18x4xbf16, #tpu.memory_space<vmem>>, vector<1x16x16x4xbf16>
    %5 = vector.shape_cast %4 : vector<1x16x16x4xbf16> to vector<16x16x4xbf16>
    %6 = vector.shape_cast %5 : vector<16x16x4xbf16> to vector<256x4xbf16>
    %c0_i32_2 = arith.constant 0 : i32
    %7 = arith.addi %1, %c0_i32_2 : i32
    %c0_3 = arith.constant 0 : index
    %8 = arith.index_cast %7 : i32 to index
    %c1 = arith.constant 1 : index
    %c0_4 = arith.constant 0 : index
    %9 = vector.load %arg2[%c0_3, %8, %c1, %c0_4] : memref<1x18x18x4xbf16, #tpu.memory_space<vmem>>, vector<1x16x16x4xbf16>
    %10 = vector.shape_cast %9 : vector<1x16x16x4xbf16> to vector<16x16x4xbf16>
    %11 = vector.shape_cast %10 : vector<16x16x4xbf16> to vector<256x4xbf16>
    %c0_i32_5 = arith.constant 0 : i32
    %12 = arith.addi %1, %c0_i32_5 : i32
    %c0_6 = arith.constant 0 : index
    %13 = arith.index_cast %12 : i32 to index
    %c2 = arith.constant 2 : index
    %c0_7 = arith.constant 0 : index
    %14 = vector.load %arg2[%c0_6, %13, %c2, %c0_7] : memref<1x18x18x4xbf16, #tpu.memory_space<vmem>>, vector<1x16x16x4xbf16>
    %15 = vector.shape_cast %14 : vector<1x16x16x4xbf16> to vector<16x16x4xbf16>
    %16 = vector.shape_cast %15 : vector<16x16x4xbf16> to vector<256x4xbf16>
    %c1_i32 = arith.constant 1 : i32
    %17 = arith.addi %1, %c1_i32 : i32
    %c0_8 = arith.constant 0 : index
    %18 = arith.index_cast %17 : i32 to index
    %c0_9 = arith.constant 0 : index
    %c0_10 = arith.constant 0 : index
    %19 = vector.load %arg2[%c0_8, %18, %c0_9, %c0_10] : memref<1x18x18x4xbf16, #tpu.memory_space<vmem>>, vector<1x16x16x4xbf16>
    %20 = vector.shape_cast %19 : vector<1x16x16x4xbf16> to vector<16x16x4xbf16>
    %21 = vector.shape_cast %20 : vector<16x16x4xbf16> to vector<256x4xbf16>
    %c1_i32_11 = arith.constant 1 : i32
    %22 = arith.addi %1, %c1_i32_11 : i32
    %c0_12 = arith.constant 0 : index
    %23 = arith.index_cast %22 : i32 to index
    %c1_13 = arith.constant 1 : index
    %c0_14 = arith.constant 0 : index
    %24 = vector.load %arg2[%c0_12, %23, %c1_13, %c0_14] : memref<1x18x18x4xbf16, #tpu.memory_space<vmem>>, vector<1x16x16x4xbf16>
    %25 = vector.shape_cast %24 : vector<1x16x16x4xbf16> to vector<16x16x4xbf16>
    %26 = vector.shape_cast %25 : vector<16x16x4xbf16> to vector<256x4xbf16>
    %c1_i32_15 = arith.constant 1 : i32
    %27 = arith.addi %1, %c1_i32_15 : i32
    %c0_16 = arith.constant 0 : index
    %28 = arith.index_cast %27 : i32 to index
    %c2_17 = arith.constant 2 : index
    %c0_18 = arith.constant 0 : index
    %29 = vector.load %arg2[%c0_16, %28, %c2_17, %c0_18] : memref<1x18x18x4xbf16, #tpu.memory_space<vmem>>, vector<1x16x16x4xbf16>
    %30 = vector.shape_cast %29 : vector<1x16x16x4xbf16> to vector<16x16x4xbf16>
    %31 = vector.shape_cast %30 : vector<16x16x4xbf16> to vector<256x4xbf16>
    %c2_i32 = arith.constant 2 : i32
    %32 = arith.addi %1, %c2_i32 : i32
    %c0_19 = arith.constant 0 : index
    %33 = arith.index_cast %32 : i32 to index
    %c0_20 = arith.constant 0 : index
    %c0_21 = arith.constant 0 : index
    %34 = vector.load %arg2[%c0_19, %33, %c0_20, %c0_21] : memref<1x18x18x4xbf16, #tpu.memory_space<vmem>>, vector<1x16x16x4xbf16>
    %35 = vector.shape_cast %34 : vector<1x16x16x4xbf16> to vector<16x16x4xbf16>
    %36 = vector.shape_cast %35 : vector<16x16x4xbf16> to vector<256x4xbf16>
    %c2_i32_22 = arith.constant 2 : i32
    %37 = arith.addi %1, %c2_i32_22 : i32
    %c0_23 = arith.constant 0 : index
    %38 = arith.index_cast %37 : i32 to index
    %c1_24 = arith.constant 1 : index
    %c0_25 = arith.constant 0 : index
    %39 = vector.load %arg2[%c0_23, %38, %c1_24, %c0_25] : memref<1x18x18x4xbf16, #tpu.memory_space<vmem>>, vector<1x16x16x4xbf16>
    %40 = vector.shape_cast %39 : vector<1x16x16x4xbf16> to vector<16x16x4xbf16>
    %41 = vector.shape_cast %40 : vector<16x16x4xbf16> to vector<256x4xbf16>
    %c2_i32_26 = arith.constant 2 : i32
    %42 = arith.addi %1, %c2_i32_26 : i32
    %c0_27 = arith.constant 0 : index
    %43 = arith.index_cast %42 : i32 to index
    %c2_28 = arith.constant 2 : index
    %c0_29 = arith.constant 0 : index
    %44 = vector.load %arg2[%c0_27, %43, %c2_28, %c0_29] : memref<1x18x18x4xbf16, #tpu.memory_space<vmem>>, vector<1x16x16x4xbf16>
    %45 = vector.shape_cast %44 : vector<1x16x16x4xbf16> to vector<16x16x4xbf16>
    %46 = vector.shape_cast %45 : vector<16x16x4xbf16> to vector<256x4xbf16>
    %47 = tpu.concatenate %6, %11, %16, %21, %26, %31, %36, %41, %46 in 1 : vector<256x4xbf16>, vector<256x4xbf16>, vector<256x4xbf16>, vector<256x4xbf16>, vector<256x4xbf16>, vector<256x4xbf16>, vector<256x4xbf16>, vector<256x4xbf16>, vector<256x4xbf16> -> vector<256x36xbf16>
    %c0_30 = arith.constant 0 : index
    %c0_31 = arith.constant 0 : index
    %48 = vector.load %arg3[%c0_30, %c0_31] : memref<36x8xbf16, #tpu.memory_space<vmem>>, vector<36x8xbf16>
    %cst = arith.constant dense<0.000000e+00> : vector<256x8xf32>
    %49 = tpu.matmul %47, %48, %cst {dimension_numbers = #tpu.dot_dimension_numbers<[1], [0], [0], [1], [0, 0, 1, 1], [], []>} : vector<256x36xbf16>, vector<36x8xbf16>, vector<256x8xf32> -> vector<256x8xf32>
    %50 = vector.shape_cast %49 : vector<256x8xf32> to vector<16x16x8xf32>
    %51 = arith.truncf %50 : vector<16x16x8xf32> to vector<16x16x8xbf16>
    %c0_32 = arith.constant 0 : index
    %c0_33 = arith.constant 0 : index
    %c0_34 = arith.constant 0 : index
    %c0_35 = arith.constant 0 : index
    %52 = vector.load %arg4[%c0_32, %c0_33, %c0_34, %c0_35] : memref<1x16x16x8xbf16, #tpu.memory_space<vmem>>, vector<1x16x16x8xbf16>
    %53 = vector.shape_cast %52 : vector<1x16x16x8xbf16> to vector<16x16x8xbf16>
    %54 = vector.shape_cast %51 : vector<16x16x8xbf16> to vector<1x16x16x8xbf16>
    tpu.vector_store %arg4[%c0_32, %c0_33, %c0_34, %c0_35], %54 {strides = array<i32>} : memref<1x16x16x8xbf16, #tpu.memory_space<vmem>>, vector<1x16x16x8xbf16>,
    return
  }
  func.func @transform_0(%arg0: i32, %arg1: i32) -> (i32, i32, i32, i32) {
    %c0_i32 = arith.constant 0 : i32
    %c0_i32_0 = arith.constant 0 : i32
    %c0_i32_1 = arith.constant 0 : i32
    %c0_i32_2 = arith.constant 0 : i32
    return %arg0, %c0_i32, %c0_i32_0, %c0_i32_1 : i32, i32, i32, i32
  }
  func.func @transform_1(%arg0: i32, %arg1: i32) -> (i32, i32) {
    %c0_i32 = arith.constant 0 : i32
    %c0_i32_0 = arith.constant 0 : i32
    %c0_i32_1 = arith.constant 0 : i32
    return %c0_i32, %c0_i32_0 : i32, i32
  }
  func.func @transform_2(%arg0: i32, %arg1: i32) -> (i32, i32, i32, i32) {
    %c0_i32 = arith.constant 0 : i32
    %c0_i32_0 = arith.constant 0 : i32
    %c0_i32_1 = arith.constant 0 : i32
    return %arg0, %arg1, %c0_i32, %c0_i32_0 : i32, i32, i32, i32
  }
}

</mosaic_0001>

<llo_original>
// kernel: tpu_custom_call.1
$region0: #{tpu_custom_call.1}
  #allocation0 [shape = 'u32[]', space=smem, size = 0x4, offset = 0x4, fixed_abs, tag = 'smem constant byte address 0x4 - core index']
  #allocation1 [shape = 'u32[144,128]{1,0:T(1,128)}', space=vmem, size = 0x12000, scoped, tag = 'internal scratch']
  %s0 = inlined_call_operand.vmem [shape: bf16[2,18,18,4], index: 0, kind: input, shape index: {}]
  %s1 = inlined_call_operand.vmem [shape: bf16[36,8], index: 1, kind: input, shape index: {}]
  %s2 = inlined_call_operand.vmem [shape: bf16[2,16,16,8], index: 2, kind: output, shape index: {}]
  %s3 = sld [smem:[#allocation0]]
  $region41: #{tpu_custom_call.1} parent=0
    _
  %s5 = ssub.s32 1, %s3
  %s6 = scalar_select 0, %s5, %s3
  loop: start=0, step=1, limit=4
  $region2: #{tpu_custom_call.1} parent=0 // loop_pre_header
    _
  $region3: #{tpu_custom_call.1} parent=0 // loop_header
    %s8 = sphi 0, %s12
    %p9 = scmp.ge.s32.totalorder %s8, 4
    %s15 = sphi 0, %s27
    %s16 = sphi 0, %s23
    %s17 = sphi 0, %s15
    %s18 = sphi 0, %s16
    %s19 = sphi 0, %s17
    %s20 = sphi 0, %s18
    %s30 = sphi 0, %s32
    %s33 = sphi 0, %s30
    %s34 = sphi 0, %s33
    %s50 = sphi 0, %s34
    %s54 = sphi 0, %s54
    %s56 = sphi 0, %s54
    %s57 = sphi 0, %s56
    %s71 = sphi 0, %s57
    %s79 = sphi 0, %s81
    %s82 = sphi 0, %s79
    %s83 = sphi 0, %s82
    %s99 = sphi 0, %s83
  $region4: #{tpu_custom_call.1} parent=0 // loop_header_branch
    %11 = sbr.rel (%p9) target = $region8
  $region5: #{tpu_custom_call.1} parent=0 // loop_body
    %s13 = ssub.s32 %s8, 1
    %s14 = ssub.s32 %s8, 2
    %s21 = sadd.s32 1, %s16
    %p22 = scmp.ge.s32.totalorder %s21, 1
    %s23 = scalar_select %p22, 0, %s21
    %s24 = sadd.s32 1, %s15
    %s25 = scalar_select %p22, %s24, %s15
    %p26 = scmp.ge.s32.totalorder %s25, 2
    %s27 = scalar_select %p26, 0, %s25
    %s28 = ssub.s32 %s15, %s27
    %p29 = scmp.eq.s32.totalorder %s28, 0
    %s31 = sadd.s32 %s30, 1
    %s32 = scalar_select %p29, %s30, %s31
    %p35 = pneg %p29
    %p36 = scmp.eq.s32.totalorder %s8, 1
    %p37 = por %p35, %p36
    %p38 = scmp.ne.s32.totalorder %s30, %s33
    %p39 = scmp.eq.s32.totalorder %s8, 0
    %p40 = por %p38, %p39
    %p41 = scmp.ne.s32.totalorder %s30, %s33
    %p42 = scmp.eq.s32.totalorder %s13, 1
    %p43 = por %p41, %p42
    %p44 = scmp.ne.s32.totalorder %s33, %s34
    %p45 = scmp.eq.s32.totalorder %s13, 0
    %p46 = por %p44, %p45
    %p47 = scmp.ne.s32.totalorder %s33, %s34
    %p48 = scmp.eq.s32.totalorder %s14, 1
    %p49 = por %p47, %p48
    %p51 = scmp.ne.s32.totalorder %s34, %s50
    %p52 = scmp.eq.s32.totalorder %s14, 0
    %p53 = por %p51, %p52
    %s55 = sadd.s32 %s54, 1
    %p58 = scmp.eq.s32.totalorder %s8, 1
    %p59 = scmp.ne.s32.totalorder %s54, %s56
    %p60 = scmp.eq.s32.totalorder %s8, 0
    %p61 = por %p59, %p60
    %p62 = scmp.ne.s32.totalorder %s54, %s56
    %p63 = scmp.eq.s32.totalorder %s13, 1
    %p64 = por %p62, %p63
    %p65 = scmp.ne.s32.totalorder %s56, %s57
    %p66 = scmp.eq.s32.totalorder %s13, 0
    %p67 = por %p65, %p66
    %p68 = scmp.ne.s32.totalorder %s56, %s57
    %p69 = scmp.eq.s32.totalorder %s14, 1
    %p70 = por %p68, %p69
    %p72 = scmp.ne.s32.totalorder %s57, %s71
    %p73 = scmp.eq.s32.totalorder %s14, 0
    %p74 = por %p72, %p73
    %s75 = ssub.s32 %s15, %s27
    %s76 = ssub.s32 %s16, %s23
    %s77 = sor.u32 %s75, %s76
    %p78 = scmp.eq.s32.totalorder %s77, 0
    %s80 = sadd.s32 %s79, 1
    %s81 = scalar_select %p78, %s79, %s80
    %p84 = pneg %p78
    %p85 = scmp.eq.s32.totalorder %s8, 1
    %p86 = por %p84, %p85
    %p87 = scmp.ne.s32.totalorder %s79, %s82
    %p88 = scmp.eq.s32.totalorder %s8, 0
    %p89 = por %p87, %p88
    %p90 = scmp.ne.s32.totalorder %s79, %s82
    %p91 = scmp.eq.s32.totalorder %s13, 1
    %p92 = por %p90, %p91
    %p93 = scmp.ne.s32.totalorder %s82, %s83
    %p94 = scmp.eq.s32.totalorder %s13, 0
    %p95 = por %p93, %p94
    %p96 = scmp.ne.s32.totalorder %s82, %s83
    %p97 = scmp.eq.s32.totalorder %s14, 1
    %p98 = por %p96, %p97
    %p100 = scmp.ne.s32.totalorder %s83, %s99
    %p101 = scmp.eq.s32.totalorder %s14, 0
    %p102 = por %p100, %p101
    %p103 = scmp.le.s32.totalorder 1, %s8
    %p104 = scmp.lt.s32.totalorder %s8, 3
    %p105 = pnand %p103, %p104
    %p106 = pneg %p105
    // Predicated region
    $region9: #{tpu_custom_call.1} parent=5 // pred_check
      _
    $region10: #{tpu_custom_call.1} parent=5 // pred_check_branch
      %108 = sbr.rel (%p105) target = $region12
    $region11: #{tpu_custom_call.1} parent=5 // pred_region
      %s109 = ssub.s32 %s8, 1
      // Predicated region
      $region13: #{tpu_custom_call.1} parent=11 // pred_check
        %p110 = pneg %p46
      $region14: #{tpu_custom_call.1} parent=11 // pred_check_branch
        %112 = sbr.rel (%p110) target = $region16
      $region15: #{tpu_custom_call.1} parent=11 // pred_region
        %p113 = scmp.lt.s32.totalorder %s17, 1
        %s114 = scalar_select %p113, %s17, 1
        %s115 = smul.addr %s114, 54
        %s116 = smul.addr %s115, 4
        %s117 = scalar_lea.vmem %s0, %s116
      $region16: #{tpu_custom_call.1} parent=11 // pred_fallthru
        _
      // Predicated region
      $region17: #{tpu_custom_call.1} parent=11 // pred_check
        %p118 = pneg %p67
      $region18: #{tpu_custom_call.1} parent=11 // pred_check_branch
        %120 = sbr.rel (%p118) target = $region20
      $region19: #{tpu_custom_call.1} parent=11 // pred_region
        _
      $region20: #{tpu_custom_call.1} parent=11 // pred_fallthru
        _
    $region12: #{tpu_custom_call.1} parent=5 // pred_fallthru
      _
    %p121 = scmp.lt.s32.totalorder %s8, 2
    // Predicated region
    $region21: #{tpu_custom_call.1} parent=5 // pred_check
      %p122 = pneg %p121
    $region22: #{tpu_custom_call.1} parent=5 // pred_check_branch
      %124 = sbr.rel (%p122) target = $region24
    $region23: #{tpu_custom_call.1} parent=5 // pred_region
      _
    $region24: #{tpu_custom_call.1} parent=5 // pred_fallthru
      _
    %p125 = scmp.le.s32.totalorder 1, %s8
    %p126 = scmp.lt.s32.totalorder %s8, 3
    %p127 = pnand %p125, %p126
    %p128 = pneg %p127
    // Predicated region
    $region25: #{tpu_custom_call.1} parent=5 // pred_check
      _
    $region26: #{tpu_custom_call.1} parent=5 // pred_check_branch
      %130 = sbr.rel (%p127) target = $region28
    $region27: #{tpu_custom_call.1} parent=5 // pred_region
      %s131 = ssub.s32 %s8, 1
      %p132 = scmp.lt.s32.totalorder %s17, 1
      %s133 = scalar_select %p132, %s17, 1
      %s134 = smul.addr %s133, 54
      %s135 = smul.addr %s134, 4
      %s136 = scalar_lea.vmem %s0, %s135
      %p137 = pneg %p46
      %p138 = pneg %p43
      %p139 = pneg %p67
      %p140 = pneg %p64
      %p141 = pneg %p95
      %p142 = pneg %p92
      %s143 = smul.u32 16, %s18
      %p144 = scmp.lt.s32.totalorder %s17, 1
      %s145 = scalar_select %p144, %s17, 1
      %p146 = scmp.lt.s32.totalorder %s143, 15
      %s147 = scalar_select %p146, %s143, 15
      %s148 = smul.addr %s147, 2
      %s149 = smul.addr %s145, 32
      %s150 = sadd.s32 %s148, %s149
      %s151 = smul.addr %s150, 4
      %s152 = scalar_lea.vmem %s2, %s151
      %p153 = scmp.lt.s32.totalorder %s17, 1
      %s154 = scalar_select %p153, %s17, 1
      %s155 = smul.addr %s154, 54
      %s156 = smul.addr %s155, 4
      %s157 = scalar_lea.vmem %s0, %s156
      %s158 = smul.u32 16, %s18
      %p159 = scmp.lt.s32.totalorder %s17, 1
      %s160 = scalar_select %p159, %s17, 1
      %p161 = scmp.lt.s32.totalorder %s158, 15
      %s162 = scalar_select %p161, %s158, 15
      %s163 = smul.addr %s162, 2
      %s164 = smul.addr %s160, 32
      %s165 = sadd.s32 %s163, %s164
      %s166 = smul.addr %s165, 4
      %s167 = scalar_lea.vmem %s2, %s166
      %s168 = smul.u32 16, %s18
      %s170 = smul.u32 %s18, 16
      %s171 = smul.u32 %s170, 3
      %s172 = smul.addr %s171, 4
      %s173 = scalar_lea.vmem %s157, %s172
      %v174 = vld [vmem:[%s173] sm:$0xf]
      %v175 = vld [vmem:[%s173 + $0x4] sm:$0xf]
      %v176 = vld [vmem:[%s173 + $0xc] sm:$0xf]
      %v177 = vld [vmem:[%s173 + $0x10] sm:$0xf]
      %v178 = vld [vmem:[%s173 + $0x18] sm:$0xf]
      %v179 = vld [vmem:[%s173 + $0x1c] sm:$0xf]
      %v180 = vld [vmem:[%s173 + $0x24] sm:$0xf]
      %v181 = vld [vmem:[%s173 + $0x28] sm:$0xf]
      %v182 = vld [vmem:[%s173 + $0x30] sm:$0xf]
      %v183 = vld [vmem:[%s173 + $0x34] sm:$0xf]
      %v184 = vld [vmem:[%s173 + $0x3c] sm:$0xf]
      %v185 = vld [vmem:[%s173 + $0x40] sm:$0xf]
      %v186 = vld [vmem:[%s173 + $0x48] sm:$0xf]
      %v187 = vld [vmem:[%s173 + $0x4c] sm:$0xf]
      %v188 = vld [vmem:[%s173 + $0x54] sm:$0xf]
      %v189 = vld [vmem:[%s173 + $0x58] sm:$0xf]
      %v190 = vld [vmem:[%s173 + $0x60] sm:$0xf]
      %v191 = vld [vmem:[%s173 + $0x64] sm:$0xf]
      %v192 = vld [vmem:[%s173 + $0x6c] sm:$0xf]
      %v193 = vld [vmem:[%s173 + $0x70] sm:$0xf]
      %v194 = vld [vmem:[%s173 + $0x78] sm:$0xf]
      %v195 = vld [vmem:[%s173 + $0x7c] sm:$0xf]
      %v196 = vld [vmem:[%s173 + $0x84] sm:$0xf]
      %v197 = vld [vmem:[%s173 + $0x88] sm:$0xf]
      %v198 = vld [vmem:[%s173 + $0x90] sm:$0xf]
      %v199 = vld [vmem:[%s173 + $0x94] sm:$0xf]
      %v200 = vld [vmem:[%s173 + $0x9c] sm:$0xf]
      %v201 = vld [vmem:[%s173 + $0xa0] sm:$0xf]
      %v202 = vld [vmem:[%s173 + $0xa8] sm:$0xf]
      %v203 = vld [vmem:[%s173 + $0xac] sm:$0xf]
      %v204 = vld [vmem:[%s173 + $0xb4] sm:$0xf]
      %v205 = vld [vmem:[%s173 + $0xb8] sm:$0xf]
      %v206 = vld [vmem:[%s173 + $0x8] sm:$0x1]
      %v207 = vld [vmem:[%s173 + $0x14] sm:$0x1]
      %v208 = vld [vmem:[%s173 + $0x20] sm:$0x1]
      %v209 = vld [vmem:[%s173 + $0x2c] sm:$0x1]
      %v210 = vld [vmem:[%s173 + $0x38] sm:$0x1]
      %v211 = vld [vmem:[%s173 + $0x44] sm:$0x1]
      %v212 = vld [vmem:[%s173 + $0x50] sm:$0x1]
      %v213 = vld [vmem:[%s173 + $0x5c] sm:$0x1]
      %v214 = vld [vmem:[%s173 + $0x68] sm:$0x1]
      %v215 = vld [vmem:[%s173 + $0x74] sm:$0x1]
      %v216 = vld [vmem:[%s173 + $0x80] sm:$0x1]
      %v217 = vld [vmem:[%s173 + $0x8c] sm:$0x1]
      %v218 = vld [vmem:[%s173 + $0x98] sm:$0x1]
      %v219 = vld [vmem:[%s173 + $0xa4] sm:$0x1]
      %v220 = vld [vmem:[%s173 + $0xb0] sm:$0x1]
      %v221 = vld [vmem:[%s173 + $0xbc] sm:$0x1]
      %vm222 = vsmask.f32 3328
      %vm223 = vsmask.f32 7440
      %vm224 = vmor %vm222, %vm223
      %v226 = vshrl.u32 %v174, 16
      %v228 = vrot.slane %v226, 4
      %v229 = vshll.u32 %v174, 16
      %v231 = vrot.slane %v229, 5
      %v232 = vor.u32 %v228, %v231
      %v233 = vrot.slane %v232, 4
      %v235 = vshll.u32 %v175, 16
      %v237 = vrot.slane %v235, 5
      %v238 = vsel %vm224, %v233, %v237
      %v239 = vshrl.u32 %v175, 16
      %v241 = vrot.slane %v239, 4
      %v242 = vor.u32 %v241, %v237
      %v243 = vrot.slane %v242, 4
      %v245 = vshll.u32 %v206, 16
      %v247 = vrot.slane %v245, 5
      %v248 = vsel %vm224, %v243, %v247
      %v250 = vshrl.u32 %v176, 16
      %v252 = vrot.slane %v250, 4
      %v253 = vshll.u32 %v176, 16
      %v255 = vrot.slane %v253, 5
      %v256 = vor.u32 %v252, %v255
      %v257 = vrot.slane %v256, 4
      %v259 = vshll.u32 %v177, 16
      %v261 = vrot.slane %v259, 5
      %v262 = vsel %vm224, %v257, %v261
      %v263 = vshrl.u32 %v177, 16
      %v265 = vrot.slane %v263, 4
      %v266 = vor.u32 %v265, %v261
      %v267 = vrot.slane %v266, 4
      %v269 = vshll.u32 %v207, 16
      %v271 = vrot.slane %v269, 5
      %v272 = vsel %vm224, %v267, %v271
      %v274 = vshrl.u32 %v178, 16
      %v276 = vrot.slane %v274, 4
      %v277 = vshll.u32 %v178, 16
      %v279 = vrot.slane %v277, 5
      %v280 = vor.u32 %v276, %v279
      %v281 = vrot.slane %v280, 4
      %v283 = vshll.u32 %v179, 16
      %v285 = vrot.slane %v283, 5
      %v286 = vsel %vm224, %v281, %v285
      %v287 = vshrl.u32 %v179, 16
      %v289 = vrot.slane %v287, 4
      %v290 = vor.u32 %v289, %v285
      %v291 = vrot.slane %v290, 4
      %v293 = vshll.u32 %v208, 16
      %v295 = vrot.slane %v293, 5
      %v296 = vsel %vm224, %v291, %v295
      %v298 = vshrl.u32 %v180, 16
      %v300 = vrot.slane %v298, 4
      %v301 = vshll.u32 %v180, 16
      %v303 = vrot.slane %v301, 5
      %v304 = vor.u32 %v300, %v303
      %v305 = vrot.slane %v304, 4
      %v307 = vshll.u32 %v181, 16
      %v309 = vrot.slane %v307, 5
      %v310 = vsel %vm224, %v305, %v309
      %v311 = vshrl.u32 %v181, 16
      %v313 = vrot.slane %v311, 4
      %v314 = vor.u32 %v313, %v309
      %v315 = vrot.slane %v314, 4
      %v317 = vshll.u32 %v209, 16
      %v319 = vrot.slane %v317, 5
      %v320 = vsel %vm224, %v315, %v319
      %v322 = vshrl.u32 %v182, 16
      %v324 = vrot.slane %v322, 4
      %v325 = vshll.u32 %v182, 16
      %v327 = vrot.slane %v325, 5
      %v328 = vor.u32 %v324, %v327
      %v329 = vrot.slane %v328, 4
      %v331 = vshll.u32 %v183, 16
      %v333 = vrot.slane %v331, 5
      %v334 = vsel %vm224, %v329, %v333
      %v335 = vshrl.u32 %v183, 16
      %v337 = vrot.slane %v335, 4
      %v338 = vor.u32 %v337, %v333
      %v339 = vrot.slane %v338, 4
      %v341 = vshll.u32 %v210, 16
      %v343 = vrot.slane %v341, 5
      %v344 = vsel %vm224, %v339, %v343
      %v346 = vshrl.u32 %v184, 16
      %v348 = vrot.slane %v346, 4
      %v349 = vshll.u32 %v184, 16
      %v351 = vrot.slane %v349, 5
      %v352 = vor.u32 %v348, %v351
      %v353 = vrot.slane %v352, 4
      %v355 = vshll.u32 %v185, 16
      %v357 = vrot.slane %v355, 5
      %v358 = vsel %vm224, %v353, %v357
      %v359 = vshrl.u32 %v185, 16
      %v361 = vrot.slane %v359, 4
      %v362 = vor.u32 %v361, %v357
      %v363 = vrot.slane %v362, 4
      %v365 = vshll.u32 %v211, 16
      %v367 = vrot.slane %v365, 5
      %v368 = vsel %vm224, %v363, %v367
      %v370 = vshrl.u32 %v186, 16
      %v372 = vrot.slane %v370, 4
      %v373 = vshll.u32 %v186, 16
      %v375 = vrot.slane %v373, 5
      %v376 = vor.u32 %v372, %v375
      %v377 = vrot.slane %v376, 4
      %v379 = vshll.u32 %v187, 16
      %v381 = vrot.slane %v379, 5
      %v382 = vsel %vm224, %v377, %v381
      %v383 = vshrl.u32 %v187, 16
      %v385 = vrot.slane %v383, 4
      %v386 = vor.u32 %v385, %v381
      %v387 = vrot.slane %v386, 4
      %v389 = vshll.u32 %v212, 16
      %v391 = vrot.slane %v389, 5
      %v392 = vsel %vm224, %v387, %v391
      %v394 = vshrl.u32 %v188, 16
      %v396 = vrot.slane %v394, 4
      %v397 = vshll.u32 %v188, 16
      %v399 = vrot.slane %v397, 5
      %v400 = vor.u32 %v396, %v399
      %v401 = vrot.slane %v400, 4
      %v403 = vshll.u32 %v189, 16
      %v405 = vrot.slane %v403, 5
      %v406 = vsel %vm224, %v401, %v405
      %v407 = vshrl.u32 %v189, 16
      %v409 = vrot.slane %v407, 4
      %v410 = vor.u32 %v409, %v405
      %v411 = vrot.slane %v410, 4
      %v413 = vshll.u32 %v213, 16
      %v415 = vrot.slane %v413, 5
      %v416 = vsel %vm224, %v411, %v415
      %v418 = vshrl.u32 %v190, 16
      %v420 = vrot.slane %v418, 4
      %v421 = vshll.u32 %v190, 16
      %v423 = vrot.slane %v421, 5
      %v424 = vor.u32 %v420, %v423
      %v425 = vrot.slane %v424, 4
      %v427 = vshll.u32 %v191, 16
      %v429 = vrot.slane %v427, 5
      %v430 = vsel %vm224, %v425, %v429
      %v431 = vshrl.u32 %v191, 16
      %v433 = vrot.slane %v431, 4
      %v434 = vor.u32 %v433, %v429
      %v435 = vrot.slane %v434, 4
      %v437 = vshll.u32 %v214, 16
      %v439 = vrot.slane %v437, 5
      %v440 = vsel %vm224, %v435, %v439
      %v442 = vshrl.u32 %v192, 16
      %v444 = vrot.slane %v442, 4
      %v445 = vshll.u32 %v192, 16
      %v447 = vrot.slane %v445, 5
      %v448 = vor.u32 %v444, %v447
      %v449 = vrot.slane %v448, 4
      %v451 = vshll.u32 %v193, 16
      %v453 = vrot.slane %v451, 5
      %v454 = vsel %vm224, %v449, %v453
      %v455 = vshrl.u32 %v193, 16
      %v457 = vrot.slane %v455, 4
      %v458 = vor.u32 %v457, %v453
      %v459 = vrot.slane %v458, 4
      %v461 = vshll.u32 %v215, 16
      %v463 = vrot.slane %v461, 5
      %v464 = vsel %vm224, %v459, %v463
      %v466 = vshrl.u32 %v194, 16
      %v468 = vrot.slane %v466, 4
      %v469 = vshll.u32 %v194, 16
      %v471 = vrot.slane %v469, 5
      %v472 = vor.u32 %v468, %v471
      %v473 = vrot.slane %v472, 4
      %v475 = vshll.u32 %v195, 16
      %v477 = vrot.slane %v475, 5
      %v478 = vsel %vm224, %v473, %v477
      %v479 = vshrl.u32 %v195, 16
      %v481 = vrot.slane %v479, 4
      %v482 = vor.u32 %v481, %v477
      %v483 = vrot.slane %v482, 4
      %v485 = vshll.u32 %v216, 16
      %v487 = vrot.slane %v485, 5
      %v488 = vsel %vm224, %v483, %v487
      %v490 = vshrl.u32 %v196, 16
      %v492 = vrot.slane %v490, 4
      %v493 = vshll.u32 %v196, 16
      %v495 = vrot.slane %v493, 5
      %v496 = vor.u32 %v492, %v495
      %v497 = vrot.slane %v496, 4
      %v499 = vshll.u32 %v197, 16
      %v501 = vrot.slane %v499, 5
      %v502 = vsel %vm224, %v497, %v501
      %v503 = vshrl.u32 %v197, 16
      %v505 = vrot.slane %v503, 4
      %v506 = vor.u32 %v505, %v501
      %v507 = vrot.slane %v506, 4
      %v509 = vshll.u32 %v217, 16
      %v511 = vrot.slane %v509, 5
      %v512 = vsel %vm224, %v507, %v511
      %v514 = vshrl.u32 %v198, 16
      %v516 = vrot.slane %v514, 4
      %v517 = vshll.u32 %v198, 16
      %v519 = vrot.slane %v517, 5
      %v520 = vor.u32 %v516, %v519
      %v521 = vrot.slane %v520, 4
      %v523 = vshll.u32 %v199, 16
      %v525 = vrot.slane %v523, 5
      %v526 = vsel %vm224, %v521, %v525
      %v527 = vshrl.u32 %v199, 16
      %v529 = vrot.slane %v527, 4
      %v530 = vor.u32 %v529, %v525
      %v531 = vrot.slane %v530, 4
      %v533 = vshll.u32 %v218, 16
      %v535 = vrot.slane %v533, 5
      %v536 = vsel %vm224, %v531, %v535
      %v538 = vshrl.u32 %v200, 16
      %v540 = vrot.slane %v538, 4
      %v541 = vshll.u32 %v200, 16
      %v543 = vrot.slane %v541, 5
      %v544 = vor.u32 %v540, %v543
      %v545 = vrot.slane %v544, 4
      %v547 = vshll.u32 %v201, 16
      %v549 = vrot.slane %v547, 5
      %v550 = vsel %vm224, %v545, %v549
      %v551 = vshrl.u32 %v201, 16
      %v553 = vrot.slane %v551, 4
      %v554 = vor.u32 %v553, %v549
      %v555 = vrot.slane %v554, 4
      %v557 = vshll.u32 %v219, 16
      %v559 = vrot.slane %v557, 5
      %v560 = vsel %vm224, %v555, %v559
      %v562 = vshrl.u32 %v202, 16
      %v564 = vrot.slane %v562, 4
      %v565 = vshll.u32 %v202, 16
      %v567 = vrot.slane %v565, 5
      %v568 = vor.u32 %v564, %v567
      %v569 = vrot.slane %v568, 4
      %v571 = vshll.u32 %v203, 16
      %v573 = vrot.slane %v571, 5
      %v574 = vsel %vm224, %v569, %v573
      %v575 = vshrl.u32 %v203, 16
      %v577 = vrot.slane %v575, 4
      %v578 = vor.u32 %v577, %v573
      %v579 = vrot.slane %v578, 4
      %v581 = vshll.u32 %v220, 16
      %v583 = vrot.slane %v581, 5
      %v584 = vsel %vm224, %v579, %v583
      %v586 = vshrl.u32 %v204, 16
      %v588 = vrot.slane %v586, 4
      %v589 = vshll.u32 %v204, 16
      %v591 = vrot.slane %v589, 5
      %v592 = vor.u32 %v588, %v591
      %v593 = vrot.slane %v592, 4
      %v595 = vshll.u32 %v205, 16
      %v597 = vrot.slane %v595, 5
      %v598 = vsel %vm224, %v593, %v597
      %v599 = vshrl.u32 %v205, 16
      %v601 = vrot.slane %v599, 4
      %v602 = vor.u32 %v601, %v597
      %v603 = vrot.slane %v602, 4
      %v605 = vshll.u32 %v221, 16
      %v607 = vrot.slane %v605, 5
      %v608 = vsel %vm224, %v603, %v607
      %v609 = vld [vmem:[%s173] sm:$0xe]
      %v610 = vld [vmem:[%s173 + $0xc] sm:$0xe]
      %v611 = vld [vmem:[%s173 + $0x18] sm:$0xe]
      %v612 = vld [vmem:[%s173 + $0x24] sm:$0xe]
      %v613 = vld [vmem:[%s173 + $0x30] sm:$0xe]
      %v614 = vld [vmem:[%s173 + $0x3c] sm:$0xe]
      %v615 = vld [vmem:[%s173 + $0x48] sm:$0xe]
      %v616 = vld [vmem:[%s173 + $0x54] sm:$0xe]
      %v617 = vld [vmem:[%s173 + $0x60] sm:$0xe]
      %v618 = vld [vmem:[%s173 + $0x6c] sm:$0xe]
      %v619 = vld [vmem:[%s173 + $0x78] sm:$0xe]
      %v620 = vld [vmem:[%s173 + $0x84] sm:$0xe]
      %v621 = vld [vmem:[%s173 + $0x90] sm:$0xe]
      %v622 = vld [vmem:[%s173 + $0x9c] sm:$0xe]
      %v623 = vld [vmem:[%s173 + $0xa8] sm:$0xe]
      %v624 = vld [vmem:[%s173 + $0xb4] sm:$0xe]
      %vm673 = vcmask 1042432
      %vm674 = vcmask 1046532
      %vm675 = vmor %vm673, %vm674
      %v676 = vrot.slane %v609, 5
      %v677 = vrot.slane %v676, 4
      %v678 = vrot.slane %v175, 5
      %v679 = vsel %vm675, %v677, %v678
      %v680 = vrot.slane %v678, 4
      %v681 = vrot.slane %v206, 5
      %v682 = vsel %vm675, %v680, %v681
      %v683 = vrot.slane %v610, 5
      %v684 = vrot.slane %v683, 4
      %v685 = vrot.slane %v177, 5
      %v686 = vsel %vm675, %v684, %v685
      %v687 = vrot.slane %v685, 4
      %v688 = vrot.slane %v207, 5
      %v689 = vsel %vm675, %v687, %v688
      %v690 = vrot.slane %v611, 5
      %v691 = vrot.slane %v690, 4
      %v692 = vrot.slane %v179, 5
      %v693 = vsel %vm675, %v691, %v692
      %v694 = vrot.slane %v692, 4
      %v695 = vrot.slane %v208, 5
      %v696 = vsel %vm675, %v694, %v695
      %v697 = vrot.slane %v612, 5
      %v698 = vrot.slane %v697, 4
      %v699 = vrot.slane %v181, 5
      %v700 = vsel %vm675, %v698, %v699
      %v701 = vrot.slane %v699, 4
      %v702 = vrot.slane %v209, 5
      %v703 = vsel %vm675, %v701, %v702
      %v704 = vrot.slane %v613, 5
      %v705 = vrot.slane %v704, 4
      %v706 = vrot.slane %v183, 5
      %v707 = vsel %vm675, %v705, %v706
      %v708 = vrot.slane %v706, 4
      %v709 = vrot.slane %v210, 5
      %v710 = vsel %vm675, %v708, %v709
      %v711 = vrot.slane %v614, 5
      %v712 = vrot.slane %v711, 4
      %v713 = vrot.slane %v185, 5
      %v714 = vsel %vm675, %v712, %v713
      %v715 = vrot.slane %v713, 4
      %v716 = vrot.slane %v211, 5
      %v717 = vsel %vm675, %v715, %v716
      %v718 = vrot.slane %v615, 5
      %v719 = vrot.slane %v718, 4
      %v720 = vrot.slane %v187, 5
      %v721 = vsel %vm675, %v719, %v720
      %v722 = vrot.slane %v720, 4
      %v723 = vrot.slane %v212, 5
      %v724 = vsel %vm675, %v722, %v723
      %v725 = vrot.slane %v616, 5
      %v726 = vrot.slane %v725, 4
      %v727 = vrot.slane %v189, 5
      %v728 = vsel %vm675, %v726, %v727
      %v729 = vrot.slane %v727, 4
      %v730 = vrot.slane %v213, 5
      %v731 = vsel %vm675, %v729, %v730
      %v732 = vrot.slane %v617, 5
      %v733 = vrot.slane %v732, 4
      %v734 = vrot.slane %v191, 5
      %v735 = vsel %vm675, %v733, %v734
      %v736 = vrot.slane %v734, 4
      %v737 = vrot.slane %v214, 5
      %v738 = vsel %vm675, %v736, %v737
      %v739 = vrot.slane %v618, 5
      %v740 = vrot.slane %v739, 4
      %v741 = vrot.slane %v193, 5
      %v742 = vsel %vm675, %v740, %v741
      %v743 = vrot.slane %v741, 4
      %v744 = vrot.slane %v215, 5
      %v745 = vsel %vm675, %v743, %v744
      %v746 = vrot.slane %v619, 5
      %v747 = vrot.slane %v746, 4
      %v748 = vrot.slane %v195, 5
      %v749 = vsel %vm675, %v747, %v748
      %v750 = vrot.slane %v748, 4
      %v751 = vrot.slane %v216, 5
      %v752 = vsel %vm675, %v750, %v751
      %v753 = vrot.slane %v620, 5
      %v754 = vrot.slane %v753, 4
      %v755 = vrot.slane %v197, 5
      %v756 = vsel %vm675, %v754, %v755
      %v757 = vrot.slane %v755, 4
      %v758 = vrot.slane %v217, 5
      %v759 = vsel %vm675, %v757, %v758
      %v760 = vrot.slane %v621, 5
      %v761 = vrot.slane %v760, 4
      %v762 = vrot.slane %v199, 5
      %v763 = vsel %vm675, %v761, %v762
      %v764 = vrot.slane %v762, 4
      %v765 = vrot.slane %v218, 5
      %v766 = vsel %vm675, %v764, %v765
      %v767 = vrot.slane %v622, 5
      %v768 = vrot.slane %v767, 4
      %v769 = vrot.slane %v201, 5
      %v770 = vsel %vm675, %v768, %v769
      %v771 = vrot.slane %v769, 4
      %v772 = vrot.slane %v219, 5
      %v773 = vsel %vm675, %v771, %v772
      %v774 = vrot.slane %v623, 5
      %v775 = vrot.slane %v774, 4
      %v776 = vrot.slane %v203, 5
      %v777 = vsel %vm675, %v775, %v776
      %v778 = vrot.slane %v776, 4
      %v779 = vrot.slane %v220, 5
      %v780 = vsel %vm675, %v778, %v779
      %v781 = vrot.slane %v624, 5
      %v782 = vrot.slane %v781, 4
      %v783 = vrot.slane %v205, 5
      %v784 = vsel %vm675, %v782, %v783
      %v785 = vrot.slane %v783, 4
      %v786 = vrot.slane %v221, 5
      %v787 = vsel %vm675, %v785, %v786
      %s788 = sadd.s32 %s170, 1
      %s789 = smul.u32 %s788, 3
      %s790 = smul.addr %s789, 4
      %s791 = scalar_lea.vmem %s157, %s790
      %v792 = vld [vmem:[%s791] sm:$0xf]
      %v793 = vld [vmem:[%s791 + $0x4] sm:$0xf]
      %v794 = vld [vmem:[%s791 + $0xc] sm:$0xf]
      %v795 = vld [vmem:[%s791 + $0x10] sm:$0xf]
      %v796 = vld [vmem:[%s791 + $0x18] sm:$0xf]
      %v797 = vld [vmem:[%s791 + $0x1c] sm:$0xf]
      %v798 = vld [vmem:[%s791 + $0x24] sm:$0xf]
      %v799 = vld [vmem:[%s791 + $0x28] sm:$0xf]
      %v800 = vld [vmem:[%s791 + $0x30] sm:$0xf]
      %v801 = vld [vmem:[%s791 + $0x34] sm:$0xf]
      %v802 = vld [vmem:[%s791 + $0x3c] sm:$0xf]
      %v803 = vld [vmem:[%s791 + $0x40] sm:$0xf]
      %v804 = vld [vmem:[%s791 + $0x48] sm:$0xf]
      %v805 = vld [vmem:[%s791 + $0x4c] sm:$0xf]
      %v806 = vld [vmem:[%s791 + $0x54] sm:$0xf]
      %v807 = vld [vmem:[%s791 + $0x58] sm:$0xf]
      %v808 = vld [vmem:[%s791 + $0x60] sm:$0xf]
      %v809 = vld [vmem:[%s791 + $0x64] sm:$0xf]
      %v810 = vld [vmem:[%s791 + $0x6c] sm:$0xf]
      %v811 = vld [vmem:[%s791 + $0x70] sm:$0xf]
      %v812 = vld [vmem:[%s791 + $0x78] sm:$0xf]
      %v813 = vld [vmem:[%s791 + $0x7c] sm:$0xf]
      %v814 = vld [vmem:[%s791 + $0x84] sm:$0xf]
      %v815 = vld [vmem:[%s791 + $0x88] sm:$0xf]
      %v816 = vld [vmem:[%s791 + $0x90] sm:$0xf]
      %v817 = vld [vmem:[%s791 + $0x94] sm:$0xf]
      %v818 = vld [vmem:[%s791 + $0x9c] sm:$0xf]
      %v819 = vld [vmem:[%s791 + $0xa0] sm:$0xf]
      %v820 = vld [vmem:[%s791 + $0xa8] sm:$0xf]
      %v821 = vld [vmem:[%s791 + $0xac] sm:$0xf]
      %v822 = vld [vmem:[%s791 + $0xb4] sm:$0xf]
      %v823 = vld [vmem:[%s791 + $0xb8] sm:$0xf]
      %v824 = vld [vmem:[%s791 + $0x8] sm:$0x1]
      %v825 = vld [vmem:[%s791 + $0x14] sm:$0x1]
      %v826 = vld [vmem:[%s791 + $0x20] sm:$0x1]
      %v827 = vld [vmem:[%s791 + $0x2c] sm:$0x1]
      %v828 = vld [vmem:[%s791 + $0x38] sm:$0x1]
      %v829 = vld [vmem:[%s791 + $0x44] sm:$0x1]
      %v830 = vld [vmem:[%s791 + $0x50] sm:$0x1]
      %v831 = vld [vmem:[%s791 + $0x5c] sm:$0x1]
      %v832 = vld [vmem:[%s791 + $0x68] sm:$0x1]
      %v833 = vld [vmem:[%s791 + $0x74] sm:$0x1]
      %v834 = vld [vmem:[%s791 + $0x80] sm:$0x1]
      %v835 = vld [vmem:[%s791 + $0x8c] sm:$0x1]
      %v836 = vld [vmem:[%s791 + $0x98] sm:$0x1]
      %v837 = vld [vmem:[%s791 + $0xa4] sm:$0x1]
      %v838 = vld [vmem:[%s791 + $0xb0] sm:$0x1]
      %v839 = vld [vmem:[%s791 + $0xbc] sm:$0x1]
      %v841 = vshrl.u32 %v792, 16
      %v843 = vrot.slane %v841, 4
      %v844 = vshll.u32 %v792, 16
      %v846 = vrot.slane %v844, 5
      %v847 = vor.u32 %v843, %v846
      %v848 = vrot.slane %v847, 4
      %v850 = vshll.u32 %v793, 16
      %v852 = vrot.slane %v850, 5
      %v853 = vsel %vm224, %v848, %v852
      %v854 = vshrl.u32 %v793, 16
      %v856 = vrot.slane %v854, 4
      %v857 = vor.u32 %v856, %v852
      %v858 = vrot.slane %v857, 4
      %v860 = vshll.u32 %v824, 16
      %v862 = vrot.slane %v860, 5
      %v863 = vsel %vm224, %v858, %v862
      %v865 = vshrl.u32 %v794, 16
      %v867 = vrot.slane %v865, 4
      %v868 = vshll.u32 %v794, 16
      %v870 = vrot.slane %v868, 5
      %v871 = vor.u32 %v867, %v870
      %v872 = vrot.slane %v871, 4
      %v874 = vshll.u32 %v795, 16
      %v876 = vrot.slane %v874, 5
      %v877 = vsel %vm224, %v872, %v876
      %v878 = vshrl.u32 %v795, 16
      %v880 = vrot.slane %v878, 4
      %v881 = vor.u32 %v880, %v876
      %v882 = vrot.slane %v881, 4
      %v884 = vshll.u32 %v825, 16
      %v886 = vrot.slane %v884, 5
      %v887 = vsel %vm224, %v882, %v886
      %v889 = vshrl.u32 %v796, 16
      %v891 = vrot.slane %v889, 4
      %v892 = vshll.u32 %v796, 16
      %v894 = vrot.slane %v892, 5
      %v895 = vor.u32 %v891, %v894
      %v896 = vrot.slane %v895, 4
      %v898 = vshll.u32 %v797, 16
      %v900 = vrot.slane %v898, 5
      %v901 = vsel %vm224, %v896, %v900
      %v902 = vshrl.u32 %v797, 16
      %v904 = vrot.slane %v902, 4
      %v905 = vor.u32 %v904, %v900
      %v906 = vrot.slane %v905, 4
      %v908 = vshll.u32 %v826, 16
      %v910 = vrot.slane %v908, 5
      %v911 = vsel %vm224, %v906, %v910
      %v913 = vshrl.u32 %v798, 16
      %v915 = vrot.slane %v913, 4
      %v916 = vshll.u32 %v798, 16
      %v918 = vrot.slane %v916, 5
      %v919 = vor.u32 %v915, %v918
      %v920 = vrot.slane %v919, 4
      %v922 = vshll.u32 %v799, 16
      %v924 = vrot.slane %v922, 5
      %v925 = vsel %vm224, %v920, %v924
      %v926 = vshrl.u32 %v799, 16
      %v928 = vrot.slane %v926, 4
      %v929 = vor.u32 %v928, %v924
      %v930 = vrot.slane %v929, 4
      %v932 = vshll.u32 %v827, 16
      %v934 = vrot.slane %v932, 5
      %v935 = vsel %vm224, %v930, %v934
      %v937 = vshrl.u32 %v800, 16
      %v939 = vrot.slane %v937, 4
      %v940 = vshll.u32 %v800, 16
      %v942 = vrot.slane %v940, 5
      %v943 = vor.u32 %v939, %v942
      %v944 = vrot.slane %v943, 4
      %v946 = vshll.u32 %v801, 16
      %v948 = vrot.slane %v946, 5
      %v949 = vsel %vm224, %v944, %v948
      %v950 = vshrl.u32 %v801, 16
      %v952 = vrot.slane %v950, 4
      %v953 = vor.u32 %v952, %v948
      %v954 = vrot.slane %v953, 4
      %v956 = vshll.u32 %v828, 16
      %v958 = vrot.slane %v956, 5
      %v959 = vsel %vm224, %v954, %v958
      %v961 = vshrl.u32 %v802, 16
      %v963 = vrot.slane %v961, 4
      %v964 = vshll.u32 %v802, 16
      %v966 = vrot.slane %v964, 5
      %v967 = vor.u32 %v963, %v966
      %v968 = vrot.slane %v967, 4
      %v970 = vshll.u32 %v803, 16
      %v972 = vrot.slane %v970, 5
      %v973 = vsel %vm224, %v968, %v972
      %v974 = vshrl.u32 %v803, 16
      %v976 = vrot.slane %v974, 4
      %v977 = vor.u32 %v976, %v972
      %v978 = vrot.slane %v977, 4
      %v980 = vshll.u32 %v829, 16
      %v982 = vrot.slane %v980, 5
      %v983 = vsel %vm224, %v978, %v982
      %v985 = vshrl.u32 %v804, 16
      %v987 = vrot.slane %v985, 4
      %v988 = vshll.u32 %v804, 16
      %v990 = vrot.slane %v988, 5
      %v991 = vor.u32 %v987, %v990
      %v992 = vrot.slane %v991, 4
      %v994 = vshll.u32 %v805, 16
      %v996 = vrot.slane %v994, 5
      %v997 = vsel %vm224, %v992, %v996
      %v998 = vshrl.u32 %v805, 16
      %v1000 = vrot.slane %v998, 4
      %v1001 = vor.u32 %v1000, %v996
      %v1002 = vrot.slane %v1001, 4
      %v1004 = vshll.u32 %v830, 16
      %v1006 = vrot.slane %v1004, 5
      %v1007 = vsel %vm224, %v1002, %v1006
      %v1009 = vshrl.u32 %v806, 16
      %v1011 = vrot.slane %v1009, 4
      %v1012 = vshll.u32 %v806, 16
      %v1014 = vrot.slane %v1012, 5
      %v1015 = vor.u32 %v1011, %v1014
      %v1016 = vrot.slane %v1015, 4
      %v1018 = vshll.u32 %v807, 16
      %v1020 = vrot.slane %v1018, 5
      %v1021 = vsel %vm224, %v1016, %v1020
      %v1022 = vshrl.u32 %v807, 16
      %v1024 = vrot.slane %v1022, 4
      %v1025 = vor.u32 %v1024, %v1020
      %v1026 = vrot.slane %v1025, 4
      %v1028 = vshll.u32 %v831, 16
      %v1030 = vrot.slane %v1028, 5
      %v1031 = vsel %vm224, %v1026, %v1030
      %v1033 = vshrl.u32 %v808, 16
      %v1035 = vrot.slane %v1033, 4
      %v1036 = vshll.u32 %v808, 16
      %v1038 = vrot.slane %v1036, 5
      %v1039 = vor.u32 %v1035, %v1038
      %v1040 = vrot.slane %v1039, 4
      %v1042 = vshll.u32 %v809, 16
      %v1044 = vrot.slane %v1042, 5
      %v1045 = vsel %vm224, %v1040, %v1044
      %v1046 = vshrl.u32 %v809, 16
      %v1048 = vrot.slane %v1046, 4
      %v1049 = vor.u32 %v1048, %v1044
      %v1050 = vrot.slane %v1049, 4
      %v1052 = vshll.u32 %v832, 16
      %v1054 = vrot.slane %v1052, 5
      %v1055 = vsel %vm224, %v1050, %v1054
      %v1057 = vshrl.u32 %v810, 16
      %v1059 = vrot.slane %v1057, 4
      %v1060 = vshll.u32 %v810, 16
      %v1062 = vrot.slane %v1060, 5
      %v1063 = vor.u32 %v1059, %v1062
      %v1064 = vrot.slane %v1063, 4
      %v1066 = vshll.u32 %v811, 16
      %v1068 = vrot.slane %v1066, 5
      %v1069 = vsel %vm224, %v1064, %v1068
      %v1070 = vshrl.u32 %v811, 16
      %v1072 = vrot.slane %v1070, 4
      %v1073 = vor.u32 %v1072, %v1068
      %v1074 = vrot.slane %v1073, 4
      %v1076 = vshll.u32 %v833, 16
      %v1078 = vrot.slane %v1076, 5
      %v1079 = vsel %vm224, %v1074, %v1078
      %v1081 = vshrl.u32 %v812, 16
      %v1083 = vrot.slane %v1081, 4
      %v1084 = vshll.u32 %v812, 16
      %v1086 = vrot.slane %v1084, 5
      %v1087 = vor.u32 %v1083, %v1086
      %v1088 = vrot.slane %v1087, 4
      %v1090 = vshll.u32 %v813, 16
      %v1092 = vrot.slane %v1090, 5
      %v1093 = vsel %vm224, %v1088, %v1092
      %v1094 = vshrl.u32 %v813, 16
      %v1096 = vrot.slane %v1094, 4
      %v1097 = vor.u32 %v1096, %v1092
      %v1098 = vrot.slane %v1097, 4
      %v1100 = vshll.u32 %v834, 16
      %v1102 = vrot.slane %v1100, 5
      %v1103 = vsel %vm224, %v1098, %v1102
      %v1105 = vshrl.u32 %v814, 16
      %v1107 = vrot.slane %v1105, 4
      %v1108 = vshll.u32 %v814, 16
      %v1110 = vrot.slane %v1108, 5
      %v1111 = vor.u32 %v1107, %v1110
      %v1112 = vrot.slane %v1111, 4
      %v1114 = vshll.u32 %v815, 16
      %v1116 = vrot.slane %v1114, 5
      %v1117 = vsel %vm224, %v1112, %v1116
      %v1118 = vshrl.u32 %v815, 16
      %v1120 = vrot.slane %v1118, 4
      %v1121 = vor.u32 %v1120, %v1116
      %v1122 = vrot.slane %v1121, 4
      %v1124 = vshll.u32 %v835, 16
      %v1126 = vrot.slane %v1124, 5
      %v1127 = vsel %vm224, %v1122, %v1126
      %v1129 = vshrl.u32 %v816, 16
      %v1131 = vrot.slane %v1129, 4
      %v1132 = vshll.u32 %v816, 16
      %v1134 = vrot.slane %v1132, 5
      %v1135 = vor.u32 %v1131, %v1134
      %v1136 = vrot.slane %v1135, 4
      %v1138 = vshll.u32 %v817, 16
      %v1140 = vrot.slane %v1138, 5
      %v1141 = vsel %vm224, %v1136, %v1140
      %v1142 = vshrl.u32 %v817, 16
      %v1144 = vrot.slane %v1142, 4
      %v1145 = vor.u32 %v1144, %v1140
      %v1146 = vrot.slane %v1145, 4
      %v1148 = vshll.u32 %v836, 16
      %v1150 = vrot.slane %v1148, 5
      %v1151 = vsel %vm224, %v1146, %v1150
      %v1153 = vshrl.u32 %v818, 16
      %v1155 = vrot.slane %v1153, 4
      %v1156 = vshll.u32 %v818, 16
      %v1158 = vrot.slane %v1156, 5
      %v1159 = vor.u32 %v1155, %v1158
      %v1160 = vrot.slane %v1159, 4
      %v1162 = vshll.u32 %v819, 16
      %v1164 = vrot.slane %v1162, 5
      %v1165 = vsel %vm224, %v1160, %v1164
      %v1166 = vshrl.u32 %v819, 16
      %v1168 = vrot.slane %v1166, 4
      %v1169 = vor.u32 %v1168, %v1164
      %v1170 = vrot.slane %v1169, 4
      %v1172 = vshll.u32 %v837, 16
      %v1174 = vrot.slane %v1172, 5
      %v1175 = vsel %vm224, %v1170, %v1174
      %v1177 = vshrl.u32 %v820, 16
      %v1179 = vrot.slane %v1177, 4
      %v1180 = vshll.u32 %v820, 16
      %v1182 = vrot.slane %v1180, 5
      %v1183 = vor.u32 %v1179, %v1182
      %v1184 = vrot.slane %v1183, 4
      %v1186 = vshll.u32 %v821, 16
      %v1188 = vrot.slane %v1186, 5
      %v1189 = vsel %vm224, %v1184, %v1188
      %v1190 = vshrl.u32 %v821, 16
      %v1192 = vrot.slane %v1190, 4
      %v1193 = vor.u32 %v1192, %v1188
      %v1194 = vrot.slane %v1193, 4
      %v1196 = vshll.u32 %v838, 16
      %v1198 = vrot.slane %v1196, 5
      %v1199 = vsel %vm224, %v1194, %v1198
      %v1201 = vshrl.u32 %v822, 16
      %v1203 = vrot.slane %v1201, 4
      %v1204 = vshll.u32 %v822, 16
      %v1206 = vrot.slane %v1204, 5
      %v1207 = vor.u32 %v1203, %v1206
      %v1208 = vrot.slane %v1207, 4
      %v1210 = vshll.u32 %v823, 16
      %v1212 = vrot.slane %v1210, 5
      %v1213 = vsel %vm224, %v1208, %v1212
      %v1214 = vshrl.u32 %v823, 16
      %v1216 = vrot.slane %v1214, 4
      %v1217 = vor.u32 %v1216, %v1212
      %v1218 = vrot.slane %v1217, 4
      %v1220 = vshll.u32 %v839, 16
      %v1222 = vrot.slane %v1220, 5
      %v1223 = vsel %vm224, %v1218, %v1222
      %v1224 = vld [vmem:[%s791] sm:$0xe]
      %v1225 = vld [vmem:[%s791 + $0xc] sm:$0xe]
      %v1226 = vld [vmem:[%s791 + $0x18] sm:$0xe]
      %v1227 = vld [vmem:[%s791 + $0x24] sm:$0xe]
      %v1228 = vld [vmem:[%s791 + $0x30] sm:$0xe]
      %v1229 = vld [vmem:[%s791 + $0x3c] sm:$0xe]
      %v1230 = vld [vmem:[%s791 + $0x48] sm:$0xe]
      %v1231 = vld [vmem:[%s791 + $0x54] sm:$0xe]
      %v1232 = vld [vmem:[%s791 + $0x60] sm:$0xe]
      %v1233 = vld [vmem:[%s791 + $0x6c] sm:$0xe]
      %v1234 = vld [vmem:[%s791 + $0x78] sm:$0xe]
      %v1235 = vld [vmem:[%s791 + $0x84] sm:$0xe]
      %v1236 = vld [vmem:[%s791 + $0x90] sm:$0xe]
      %v1237 = vld [vmem:[%s791 + $0x9c] sm:$0xe]
      %v1238 = vld [vmem:[%s791 + $0xa8] sm:$0xe]
      %v1239 = vld [vmem:[%s791 + $0xb4] sm:$0xe]
      %v1288 = vrot.slane %v1224, 5
      %v1289 = vrot.slane %v1288, 4
      %v1290 = vrot.slane %v793, 5
      %v1291 = vsel %vm675, %v1289, %v1290
      %v1292 = vrot.slane %v1290, 4
      %v1293 = vrot.slane %v824, 5
      %v1294 = vsel %vm675, %v1292, %v1293
      %v1295 = vrot.slane %v1225, 5
      %v1296 = vrot.slane %v1295, 4
      %v1297 = vrot.slane %v795, 5
      %v1298 = vsel %vm675, %v1296, %v1297
      %v1299 = vrot.slane %v1297, 4
      %v1300 = vrot.slane %v825, 5
      %v1301 = vsel %vm675, %v1299, %v1300
      %v1302 = vrot.slane %v1226, 5
      %v1303 = vrot.slane %v1302, 4
      %v1304 = vrot.slane %v797, 5
      %v1305 = vsel %vm675, %v1303, %v1304
      %v1306 = vrot.slane %v1304, 4
      %v1307 = vrot.slane %v826, 5
      %v1308 = vsel %vm675, %v1306, %v1307
      %v1309 = vrot.slane %v1227, 5
      %v1310 = vrot.slane %v1309, 4
      %v1311 = vrot.slane %v799, 5
      %v1312 = vsel %vm675, %v1310, %v1311
      %v1313 = vrot.slane %v1311, 4
      %v1314 = vrot.slane %v827, 5
      %v1315 = vsel %vm675, %v1313, %v1314
      %v1316 = vrot.slane %v1228, 5
      %v1317 = vrot.slane %v1316, 4
      %v1318 = vrot.slane %v801, 5
      %v1319 = vsel %vm675, %v1317, %v1318
      %v1320 = vrot.slane %v1318, 4
      %v1321 = vrot.slane %v828, 5
      %v1322 = vsel %vm675, %v1320, %v1321
      %v1323 = vrot.slane %v1229, 5
      %v1324 = vrot.slane %v1323, 4
      %v1325 = vrot.slane %v803, 5
      %v1326 = vsel %vm675, %v1324, %v1325
      %v1327 = vrot.slane %v1325, 4
      %v1328 = vrot.slane %v829, 5
      %v1329 = vsel %vm675, %v1327, %v1328
      %v1330 = vrot.slane %v1230, 5
      %v1331 = vrot.slane %v1330, 4
      %v1332 = vrot.slane %v805, 5
      %v1333 = vsel %vm675, %v1331, %v1332
      %v1334 = vrot.slane %v1332, 4
      %v1335 = vrot.slane %v830, 5
      %v1336 = vsel %vm675, %v1334, %v1335
      %v1337 = vrot.slane %v1231, 5
      %v1338 = vrot.slane %v1337, 4
      %v1339 = vrot.slane %v807, 5
      %v1340 = vsel %vm675, %v1338, %v1339
      %v1341 = vrot.slane %v1339, 4
      %v1342 = vrot.slane %v831, 5
      %v1343 = vsel %vm675, %v1341, %v1342
      %v1344 = vrot.slane %v1232, 5
      %v1345 = vrot.slane %v1344, 4
      %v1346 = vrot.slane %v809, 5
      %v1347 = vsel %vm675, %v1345, %v1346
      %v1348 = vrot.slane %v1346, 4
      %v1349 = vrot.slane %v832, 5
      %v1350 = vsel %vm675, %v1348, %v1349
      %v1351 = vrot.slane %v1233, 5
      %v1352 = vrot.slane %v1351, 4
      %v1353 = vrot.slane %v811, 5
      %v1354 = vsel %vm675, %v1352, %v1353
      %v1355 = vrot.slane %v1353, 4
      %v1356 = vrot.slane %v833, 5
      %v1357 = vsel %vm675, %v1355, %v1356
      %v1358 = vrot.slane %v1234, 5
      %v1359 = vrot.slane %v1358, 4
      %v1360 = vrot.slane %v813, 5
      %v1361 = vsel %vm675, %v1359, %v1360
      %v1362 = vrot.slane %v1360, 4
      %v1363 = vrot.slane %v834, 5
      %v1364 = vsel %vm675, %v1362, %v1363
      %v1365 = vrot.slane %v1235, 5
      %v1366 = vrot.slane %v1365, 4
      %v1367 = vrot.slane %v815, 5
      %v1368 = vsel %vm675, %v1366, %v1367
      %v1369 = vrot.slane %v1367, 4
      %v1370 = vrot.slane %v835, 5
      %v1371 = vsel %vm675, %v1369, %v1370
      %v1372 = vrot.slane %v1236, 5
      %v1373 = vrot.slane %v1372, 4
      %v1374 = vrot.slane %v817, 5
      %v1375 = vsel %vm675, %v1373, %v1374
      %v1376 = vrot.slane %v1374, 4
      %v1377 = vrot.slane %v836, 5
      %v1378 = vsel %vm675, %v1376, %v1377
      %v1379 = vrot.slane %v1237, 5
      %v1380 = vrot.slane %v1379, 4
      %v1381 = vrot.slane %v819, 5
      %v1382 = vsel %vm675, %v1380, %v1381
      %v1383 = vrot.slane %v1381, 4
      %v1384 = vrot.slane %v837, 5
      %v1385 = vsel %vm675, %v1383, %v1384
      %v1386 = vrot.slane %v1238, 5
      %v1387 = vrot.slane %v1386, 4
      %v1388 = vrot.slane %v821, 5
      %v1389 = vsel %vm675, %v1387, %v1388
      %v1390 = vrot.slane %v1388, 4
      %v1391 = vrot.slane %v838, 5
      %v1392 = vsel %vm675, %v1390, %v1391
      %v1393 = vrot.slane %v1239, 5
      %v1394 = vrot.slane %v1393, 4
      %v1395 = vrot.slane %v823, 5
      %v1396 = vsel %vm675, %v1394, %v1395
      %v1397 = vrot.slane %v1395, 4
      %v1398 = vrot.slane %v839, 5
      %v1399 = vsel %vm675, %v1397, %v1398
      %s1400 = sadd.s32 %s170, 2
      %s1401 = smul.u32 %s1400, 3
      %s1402 = smul.addr %s1401, 4
      %s1403 = scalar_lea.vmem %s157, %s1402
      %v1404 = vld [vmem:[%s1403] sm:$0xf]
      %v1405 = vld [vmem:[%s1403 + $0x4] sm:$0xf]
      %v1406 = vld [vmem:[%s1403 + $0xc] sm:$0xf]
      %v1407 = vld [vmem:[%s1403 + $0x10] sm:$0xf]
      %v1408 = vld [vmem:[%s1403 + $0x18] sm:$0xf]
      %v1409 = vld [vmem:[%s1403 + $0x1c] sm:$0xf]
      %v1410 = vld [vmem:[%s1403 + $0x24] sm:$0xf]
      %v1411 = vld [vmem:[%s1403 + $0x28] sm:$0xf]
      %v1412 = vld [vmem:[%s1403 + $0x30] sm:$0xf]
      %v1413 = vld [vmem:[%s1403 + $0x34] sm:$0xf]
      %v1414 = vld [vmem:[%s1403 + $0x3c] sm:$0xf]
      %v1415 = vld [vmem:[%s1403 + $0x40] sm:$0xf]
      %v1416 = vld [vmem:[%s1403 + $0x48] sm:$0xf]
      %v1417 = vld [vmem:[%s1403 + $0x4c] sm:$0xf]
      %v1418 = vld [vmem:[%s1403 + $0x54] sm:$0xf]
      %v1419 = vld [vmem:[%s1403 + $0x58] sm:$0xf]
      %v1420 = vld [vmem:[%s1403 + $0x60] sm:$0xf]
      %v1421 = vld [vmem:[%s1403 + $0x64] sm:$0xf]
      %v1422 = vld [vmem:[%s1403 + $0x6c] sm:$0xf]
      %v1423 = vld [vmem:[%s1403 + $0x70] sm:$0xf]
      %v1424 = vld [vmem:[%s1403 + $0x78] sm:$0xf]
      %v1425 = vld [vmem:[%s1403 + $0x7c] sm:$0xf]
      %v1426 = vld [vmem:[%s1403 + $0x84] sm:$0xf]
      %v1427 = vld [vmem:[%s1403 + $0x88] sm:$0xf]
      %v1428 = vld [vmem:[%s1403 + $0x90] sm:$0xf]
      %v1429 = vld [vmem:[%s1403 + $0x94] sm:$0xf]
      %v1430 = vld [vmem:[%s1403 + $0x9c] sm:$0xf]
      %v1431 = vld [vmem:[%s1403 + $0xa0] sm:$0xf]
      %v1432 = vld [vmem:[%s1403 + $0xa8] sm:$0xf]
      %v1433 = vld [vmem:[%s1403 + $0xac] sm:$0xf]
      %v1434 = vld [vmem:[%s1403 + $0xb4] sm:$0xf]
      %v1435 = vld [vmem:[%s1403 + $0xb8] sm:$0xf]
      %v1436 = vld [vmem:[%s1403 + $0x8] sm:$0x1]
      %v1437 = vld [vmem:[%s1403 + $0x14] sm:$0x1]
      %v1438 = vld [vmem:[%s1403 + $0x20] sm:$0x1]
      %v1439 = vld [vmem:[%s1403 + $0x2c] sm:$0x1]
      %v1440 = vld [vmem:[%s1403 + $0x38] sm:$0x1]
      %v1441 = vld [vmem:[%s1403 + $0x44] sm:$0x1]
      %v1442 = vld [vmem:[%s1403 + $0x50] sm:$0x1]
      %v1443 = vld [vmem:[%s1403 + $0x5c] sm:$0x1]
      %v1444 = vld [vmem:[%s1403 + $0x68] sm:$0x1]
      %v1445 = vld [vmem:[%s1403 + $0x74] sm:$0x1]
      %v1446 = vld [vmem:[%s1403 + $0x80] sm:$0x1]
      %v1447 = vld [vmem:[%s1403 + $0x8c] sm:$0x1]
      %v1448 = vld [vmem:[%s1403 + $0x98] sm:$0x1]
      %v1449 = vld [vmem:[%s1403 + $0xa4] sm:$0x1]
      %v1450 = vld [vmem:[%s1403 + $0xb0] sm:$0x1]
      %v1451 = vld [vmem:[%s1403 + $0xbc] sm:$0x1]
      %v1453 = vshrl.u32 %v1404, 16
      %v1455 = vrot.slane %v1453, 4
      %v1456 = vshll.u32 %v1404, 16
      %v1458 = vrot.slane %v1456, 5
      %v1459 = vor.u32 %v1455, %v1458
      %v1460 = vrot.slane %v1459, 4
      %v1462 = vshll.u32 %v1405, 16
      %v1464 = vrot.slane %v1462, 5
      %v1465 = vsel %vm224, %v1460, %v1464
      %v1466 = vshrl.u32 %v1405, 16
      %v1468 = vrot.slane %v1466, 4
      %v1469 = vor.u32 %v1468, %v1464
      %v1470 = vrot.slane %v1469, 4
      %v1472 = vshll.u32 %v1436, 16
      %v1474 = vrot.slane %v1472, 5
      %v1475 = vsel %vm224, %v1470, %v1474
      %v1477 = vshrl.u32 %v1406, 16
      %v1479 = vrot.slane %v1477, 4
      %v1480 = vshll.u32 %v1406, 16
      %v1482 = vrot.slane %v1480, 5
      %v1483 = vor.u32 %v1479, %v1482
      %v1484 = vrot.slane %v1483, 4
      %v1486 = vshll.u32 %v1407, 16
      %v1488 = vrot.slane %v1486, 5
      %v1489 = vsel %vm224, %v1484, %v1488
      %v1490 = vshrl.u32 %v1407, 16
      %v1492 = vrot.slane %v1490, 4
      %v1493 = vor.u32 %v1492, %v1488
      %v1494 = vrot.slane %v1493, 4
      %v1496 = vshll.u32 %v1437, 16
      %v1498 = vrot.slane %v1496, 5
      %v1499 = vsel %vm224, %v1494, %v1498
      %v1501 = vshrl.u32 %v1408, 16
      %v1503 = vrot.slane %v1501, 4
      %v1504 = vshll.u32 %v1408, 16
      %v1506 = vrot.slane %v1504, 5
      %v1507 = vor.u32 %v1503, %v1506
      %v1508 = vrot.slane %v1507, 4
      %v1510 = vshll.u32 %v1409, 16
      %v1512 = vrot.slane %v1510, 5
      %v1513 = vsel %vm224, %v1508, %v1512
      %v1514 = vshrl.u32 %v1409, 16
      %v1516 = vrot.slane %v1514, 4
      %v1517 = vor.u32 %v1516, %v1512
      %v1518 = vrot.slane %v1517, 4
      %v1520 = vshll.u32 %v1438, 16
      %v1522 = vrot.slane %v1520, 5
      %v1523 = vsel %vm224, %v1518, %v1522
      %v1525 = vshrl.u32 %v1410, 16
      %v1527 = vrot.slane %v1525, 4
      %v1528 = vshll.u32 %v1410, 16
      %v1530 = vrot.slane %v1528, 5
      %v1531 = vor.u32 %v1527, %v1530
      %v1532 = vrot.slane %v1531, 4
      %v1534 = vshll.u32 %v1411, 16
      %v1536 = vrot.slane %v1534, 5
      %v1537 = vsel %vm224, %v1532, %v1536
      %v1538 = vshrl.u32 %v1411, 16
      %v1540 = vrot.slane %v1538, 4
      %v1541 = vor.u32 %v1540, %v1536
      %v1542 = vrot.slane %v1541, 4
      %v1544 = vshll.u32 %v1439, 16
      %v1546 = vrot.slane %v1544, 5
      %v1547 = vsel %vm224, %v1542, %v1546
      %v1549 = vshrl.u32 %v1412, 16
      %v1551 = vrot.slane %v1549, 4
      %v1552 = vshll.u32 %v1412, 16
      %v1554 = vrot.slane %v1552, 5
      %v1555 = vor.u32 %v1551, %v1554
      %v1556 = vrot.slane %v1555, 4
      %v1558 = vshll.u32 %v1413, 16
      %v1560 = vrot.slane %v1558, 5
      %v1561 = vsel %vm224, %v1556, %v1560
      %v1562 = vshrl.u32 %v1413, 16
      %v1564 = vrot.slane %v1562, 4
      %v1565 = vor.u32 %v1564, %v1560
      %v1566 = vrot.slane %v1565, 4
      %v1568 = vshll.u32 %v1440, 16
      %v1570 = vrot.slane %v1568, 5
      %v1571 = vsel %vm224, %v1566, %v1570
      %v1573 = vshrl.u32 %v1414, 16
      %v1575 = vrot.slane %v1573, 4
      %v1576 = vshll.u32 %v1414, 16
      %v1578 = vrot.slane %v1576, 5
      %v1579 = vor.u32 %v1575, %v1578
      %v1580 = vrot.slane %v1579, 4
      %v1582 = vshll.u32 %v1415, 16
      %v1584 = vrot.slane %v1582, 5
      %v1585 = vsel %vm224, %v1580, %v1584
      %v1586 = vshrl.u32 %v1415, 16
      %v1588 = vrot.slane %v1586, 4
      %v1589 = vor.u32 %v1588, %v1584
      %v1590 = vrot.slane %v1589, 4
      %v1592 = vshll.u32 %v1441, 16
      %v1594 = vrot.slane %v1592, 5
      %v1595 = vsel %vm224, %v1590, %v1594
      %v1597 = vshrl.u32 %v1416, 16
      %v1599 = vrot.slane %v1597, 4
      %v1600 = vshll.u32 %v1416, 16
      %v1602 = vrot.slane %v1600, 5
      %v1603 = vor.u32 %v1599, %v1602
      %v1604 = vrot.slane %v1603, 4
      %v1606 = vshll.u32 %v1417, 16
      %v1608 = vrot.slane %v1606, 5
      %v1609 = vsel %vm224, %v1604, %v1608
      %v1610 = vshrl.u32 %v1417, 16
      %v1612 = vrot.slane %v1610, 4
      %v1613 = vor.u32 %v1612, %v1608
      %v1614 = vrot.slane %v1613, 4
      %v1616 = vshll.u32 %v1442, 16
      %v1618 = vrot.slane %v1616, 5
      %v1619 = vsel %vm224, %v1614, %v1618
      %v1621 = vshrl.u32 %v1418, 16
      %v1623 = vrot.slane %v1621, 4
      %v1624 = vshll.u32 %v1418, 16
      %v1626 = vrot.slane %v1624, 5
      %v1627 = vor.u32 %v1623, %v1626
      %v1628 = vrot.slane %v1627, 4
      %v1630 = vshll.u32 %v1419, 16
      %v1632 = vrot.slane %v1630, 5
      %v1633 = vsel %vm224, %v1628, %v1632
      %v1634 = vshrl.u32 %v1419, 16
      %v1636 = vrot.slane %v1634, 4
      %v1637 = vor.u32 %v1636, %v1632
      %v1638 = vrot.slane %v1637, 4
      %v1640 = vshll.u32 %v1443, 16
      %v1642 = vrot.slane %v1640, 5
      %v1643 = vsel %vm224, %v1638, %v1642
      %v1645 = vshrl.u32 %v1420, 16
      %v1647 = vrot.slane %v1645, 4
      %v1648 = vshll.u32 %v1420, 16
      %v1650 = vrot.slane %v1648, 5
      %v1651 = vor.u32 %v1647, %v1650
      %v1652 = vrot.slane %v1651, 4
      %v1654 = vshll.u32 %v1421, 16
      %v1656 = vrot.slane %v1654, 5
      %v1657 = vsel %vm224, %v1652, %v1656
      %v1658 = vshrl.u32 %v1421, 16
      %v1660 = vrot.slane %v1658, 4
      %v1661 = vor.u32 %v1660, %v1656
      %v1662 = vrot.slane %v1661, 4
      %v1664 = vshll.u32 %v1444, 16
      %v1666 = vrot.slane %v1664, 5
      %v1667 = vsel %vm224, %v1662, %v1666
      %v1669 = vshrl.u32 %v1422, 16
      %v1671 = vrot.slane %v1669, 4
      %v1672 = vshll.u32 %v1422, 16
      %v1674 = vrot.slane %v1672, 5
      %v1675 = vor.u32 %v1671, %v1674
      %v1676 = vrot.slane %v1675, 4
      %v1678 = vshll.u32 %v1423, 16
      %v1680 = vrot.slane %v1678, 5
      %v1681 = vsel %vm224, %v1676, %v1680
      %v1682 = vshrl.u32 %v1423, 16
      %v1684 = vrot.slane %v1682, 4
      %v1685 = vor.u32 %v1684, %v1680
      %v1686 = vrot.slane %v1685, 4
      %v1688 = vshll.u32 %v1445, 16
      %v1690 = vrot.slane %v1688, 5
      %v1691 = vsel %vm224, %v1686, %v1690
      %v1693 = vshrl.u32 %v1424, 16
      %v1695 = vrot.slane %v1693, 4
      %v1696 = vshll.u32 %v1424, 16
      %v1698 = vrot.slane %v1696, 5
      %v1699 = vor.u32 %v1695, %v1698
      %v1700 = vrot.slane %v1699, 4
      %v1702 = vshll.u32 %v1425, 16
      %v1704 = vrot.slane %v1702, 5
      %v1705 = vsel %vm224, %v1700, %v1704
      %v1706 = vshrl.u32 %v1425, 16
      %v1708 = vrot.slane %v1706, 4
      %v1709 = vor.u32 %v1708, %v1704
      %v1710 = vrot.slane %v1709, 4
      %v1712 = vshll.u32 %v1446, 16
      %v1714 = vrot.slane %v1712, 5
      %v1715 = vsel %vm224, %v1710, %v1714
      %v1717 = vshrl.u32 %v1426, 16
      %v1719 = vrot.slane %v1717, 4
      %v1720 = vshll.u32 %v1426, 16
      %v1722 = vrot.slane %v1720, 5
      %v1723 = vor.u32 %v1719, %v1722
      %v1724 = vrot.slane %v1723, 4
      %v1726 = vshll.u32 %v1427, 16
      %v1728 = vrot.slane %v1726, 5
      %v1729 = vsel %vm224, %v1724, %v1728
      %v1730 = vshrl.u32 %v1427, 16
      %v1732 = vrot.slane %v1730, 4
      %v1733 = vor.u32 %v1732, %v1728
      %v1734 = vrot.slane %v1733, 4
      %v1736 = vshll.u32 %v1447, 16
      %v1738 = vrot.slane %v1736, 5
      %v1739 = vsel %vm224, %v1734, %v1738
      %v1741 = vshrl.u32 %v1428, 16
      %v1743 = vrot.slane %v1741, 4
      %v1744 = vshll.u32 %v1428, 16
      %v1746 = vrot.slane %v1744, 5
      %v1747 = vor.u32 %v1743, %v1746
      %v1748 = vrot.slane %v1747, 4
      %v1750 = vshll.u32 %v1429, 16
      %v1752 = vrot.slane %v1750, 5
      %v1753 = vsel %vm224, %v1748, %v1752
      %v1754 = vshrl.u32 %v1429, 16
      %v1756 = vrot.slane %v1754, 4
      %v1757 = vor.u32 %v1756, %v1752
      %v1758 = vrot.slane %v1757, 4
      %v1760 = vshll.u32 %v1448, 16
      %v1762 = vrot.slane %v1760, 5
      %v1763 = vsel %vm224, %v1758, %v1762
      %v1765 = vshrl.u32 %v1430, 16
      %v1767 = vrot.slane %v1765, 4
      %v1768 = vshll.u32 %v1430, 16
      %v1770 = vrot.slane %v1768, 5
      %v1771 = vor.u32 %v1767, %v1770
      %v1772 = vrot.slane %v1771, 4
      %v1774 = vshll.u32 %v1431, 16
      %v1776 = vrot.slane %v1774, 5
      %v1777 = vsel %vm224, %v1772, %v1776
      %v1778 = vshrl.u32 %v1431, 16
      %v1780 = vrot.slane %v1778, 4
      %v1781 = vor.u32 %v1780, %v1776
      %v1782 = vrot.slane %v1781, 4
      %v1784 = vshll.u32 %v1449, 16
      %v1786 = vrot.slane %v1784, 5
      %v1787 = vsel %vm224, %v1782, %v1786
      %v1789 = vshrl.u32 %v1432, 16
      %v1791 = vrot.slane %v1789, 4
      %v1792 = vshll.u32 %v1432, 16
      %v1794 = vrot.slane %v1792, 5
      %v1795 = vor.u32 %v1791, %v1794
      %v1796 = vrot.slane %v1795, 4
      %v1798 = vshll.u32 %v1433, 16
      %v1800 = vrot.slane %v1798, 5
      %v1801 = vsel %vm224, %v1796, %v1800
      %v1802 = vshrl.u32 %v1433, 16
      %v1804 = vrot.slane %v1802, 4
      %v1805 = vor.u32 %v1804, %v1800
      %v1806 = vrot.slane %v1805, 4
      %v1808 = vshll.u32 %v1450, 16
      %v1810 = vrot.slane %v1808, 5
      %v1811 = vsel %vm224, %v1806, %v1810
      %v1813 = vshrl.u32 %v1434, 16
      %v1815 = vrot.slane %v1813, 4
      %v1816 = vshll.u32 %v1434, 16
      %v1818 = vrot.slane %v1816, 5
      %v1819 = vor.u32 %v1815, %v1818
      %v1820 = vrot.slane %v1819, 4
      %v1822 = vshll.u32 %v1435, 16
      %v1824 = vrot.slane %v1822, 5
      %v1825 = vsel %vm224, %v1820, %v1824
      %v1826 = vshrl.u32 %v1435, 16
      %v1828 = vrot.slane %v1826, 4
      %v1829 = vor.u32 %v1828, %v1824
      %v1830 = vrot.slane %v1829, 4
      %v1832 = vshll.u32 %v1451, 16
      %v1834 = vrot.slane %v1832, 5
      %v1835 = vsel %vm224, %v1830, %v1834
      %v1836 = vld [vmem:[%s1403] sm:$0xe]
      %v1837 = vld [vmem:[%s1403 + $0xc] sm:$0xe]
      %v1838 = vld [vmem:[%s1403 + $0x18] sm:$0xe]
      %v1839 = vld [vmem:[%s1403 + $0x24] sm:$0xe]
      %v1840 = vld [vmem:[%s1403 + $0x30] sm:$0xe]
      %v1841 = vld [vmem:[%s1403 + $0x3c] sm:$0xe]
      %v1842 = vld [vmem:[%s1403 + $0x48] sm:$0xe]
      %v1843 = vld [vmem:[%s1403 + $0x54] sm:$0xe]
      %v1844 = vld [vmem:[%s1403 + $0x60] sm:$0xe]
      %v1845 = vld [vmem:[%s1403 + $0x6c] sm:$0xe]
      %v1846 = vld [vmem:[%s1403 + $0x78] sm:$0xe]
      %v1847 = vld [vmem:[%s1403 + $0x84] sm:$0xe]
      %v1848 = vld [vmem:[%s1403 + $0x90] sm:$0xe]
      %v1849 = vld [vmem:[%s1403 + $0x9c] sm:$0xe]
      %v1850 = vld [vmem:[%s1403 + $0xa8] sm:$0xe]
      %v1851 = vld [vmem:[%s1403 + $0xb4] sm:$0xe]
      %v1900 = vrot.slane %v1836, 5
      %v1901 = vrot.slane %v1900, 4
      %v1902 = vrot.slane %v1405, 5
      %v1903 = vsel %vm675, %v1901, %v1902
      %v1904 = vrot.slane %v1902, 4
      %v1905 = vrot.slane %v1436, 5
      %v1906 = vsel %vm675, %v1904, %v1905
      %v1907 = vrot.slane %v1837, 5
      %v1908 = vrot.slane %v1907, 4
      %v1909 = vrot.slane %v1407, 5
      %v1910 = vsel %vm675, %v1908, %v1909
      %v1911 = vrot.slane %v1909, 4
      %v1912 = vrot.slane %v1437, 5
      %v1913 = vsel %vm675, %v1911, %v1912
      %v1914 = vrot.slane %v1838, 5
      %v1915 = vrot.slane %v1914, 4
      %v1916 = vrot.slane %v1409, 5
      %v1917 = vsel %vm675, %v1915, %v1916
      %v1918 = vrot.slane %v1916, 4
      %v1919 = vrot.slane %v1438, 5
      %v1920 = vsel %vm675, %v1918, %v1919
      %v1921 = vrot.slane %v1839, 5
      %v1922 = vrot.slane %v1921, 4
      %v1923 = vrot.slane %v1411, 5
      %v1924 = vsel %vm675, %v1922, %v1923
      %v1925 = vrot.slane %v1923, 4
      %v1926 = vrot.slane %v1439, 5
      %v1927 = vsel %vm675, %v1925, %v1926
      %v1928 = vrot.slane %v1840, 5
      %v1929 = vrot.slane %v1928, 4
      %v1930 = vrot.slane %v1413, 5
      %v1931 = vsel %vm675, %v1929, %v1930
      %v1932 = vrot.slane %v1930, 4
      %v1933 = vrot.slane %v1440, 5
      %v1934 = vsel %vm675, %v1932, %v1933
      %v1935 = vrot.slane %v1841, 5
      %v1936 = vrot.slane %v1935, 4
      %v1937 = vrot.slane %v1415, 5
      %v1938 = vsel %vm675, %v1936, %v1937
      %v1939 = vrot.slane %v1937, 4
      %v1940 = vrot.slane %v1441, 5
      %v1941 = vsel %vm675, %v1939, %v1940
      %v1942 = vrot.slane %v1842, 5
      %v1943 = vrot.slane %v1942, 4
      %v1944 = vrot.slane %v1417, 5
      %v1945 = vsel %vm675, %v1943, %v1944
      %v1946 = vrot.slane %v1944, 4
      %v1947 = vrot.slane %v1442, 5
      %v1948 = vsel %vm675, %v1946, %v1947
      %v1949 = vrot.slane %v1843, 5
      %v1950 = vrot.slane %v1949, 4
      %v1951 = vrot.slane %v1419, 5
      %v1952 = vsel %vm675, %v1950, %v1951
      %v1953 = vrot.slane %v1951, 4
      %v1954 = vrot.slane %v1443, 5
      %v1955 = vsel %vm675, %v1953, %v1954
      %v1956 = vrot.slane %v1844, 5
      %v1957 = vrot.slane %v1956, 4
      %v1958 = vrot.slane %v1421, 5
      %v1959 = vsel %vm675, %v1957, %v1958
      %v1960 = vrot.slane %v1958, 4
      %v1961 = vrot.slane %v1444, 5
      %v1962 = vsel %vm675, %v1960, %v1961
      %v1963 = vrot.slane %v1845, 5
      %v1964 = vrot.slane %v1963, 4
      %v1965 = vrot.slane %v1423, 5
      %v1966 = vsel %vm675, %v1964, %v1965
      %v1967 = vrot.slane %v1965, 4
      %v1968 = vrot.slane %v1445, 5
      %v1969 = vsel %vm675, %v1967, %v1968
      %v1970 = vrot.slane %v1846, 5
      %v1971 = vrot.slane %v1970, 4
      %v1972 = vrot.slane %v1425, 5
      %v1973 = vsel %vm675, %v1971, %v1972
      %v1974 = vrot.slane %v1972, 4
      %v1975 = vrot.slane %v1446, 5
      %v1976 = vsel %vm675, %v1974, %v1975
      %v1977 = vrot.slane %v1847, 5
      %v1978 = vrot.slane %v1977, 4
      %v1979 = vrot.slane %v1427, 5
      %v1980 = vsel %vm675, %v1978, %v1979
      %v1981 = vrot.slane %v1979, 4
      %v1982 = vrot.slane %v1447, 5
      %v1983 = vsel %vm675, %v1981, %v1982
      %v1984 = vrot.slane %v1848, 5
      %v1985 = vrot.slane %v1984, 4
      %v1986 = vrot.slane %v1429, 5
      %v1987 = vsel %vm675, %v1985, %v1986
      %v1988 = vrot.slane %v1986, 4
      %v1989 = vrot.slane %v1448, 5
      %v1990 = vsel %vm675, %v1988, %v1989
      %v1991 = vrot.slane %v1849, 5
      %v1992 = vrot.slane %v1991, 4
      %v1993 = vrot.slane %v1431, 5
      %v1994 = vsel %vm675, %v1992, %v1993
      %v1995 = vrot.slane %v1993, 4
      %v1996 = vrot.slane %v1449, 5
      %v1997 = vsel %vm675, %v1995, %v1996
      %v1998 = vrot.slane %v1850, 5
      %v1999 = vrot.slane %v1998, 4
      %v2000 = vrot.slane %v1433, 5
      %v2001 = vsel %vm675, %v1999, %v2000
      %v2002 = vrot.slane %v2000, 4
      %v2003 = vrot.slane %v1450, 5
      %v2004 = vsel %vm675, %v2002, %v2003
      %v2005 = vrot.slane %v1851, 5
      %v2006 = vrot.slane %v2005, 4
      %v2007 = vrot.slane %v1435, 5
      %v2008 = vsel %vm675, %v2006, %v2007
      %v2009 = vrot.slane %v2007, 4
      %v2010 = vrot.slane %v1451, 5
      %v2011 = vsel %vm675, %v2009, %v2010
      %v2028 = vunpack.c.l.b16 %v174
      %v2029 = vunpack.c.l.b16 %v175
      %v2030 = vunpack.c.l.b16 %v176
      %v2031 = vunpack.c.l.b16 %v177
      %v2032 = vunpack.c.l.b16 %v178
      %v2033 = vunpack.c.l.b16 %v179
      %v2034 = vunpack.c.l.b16 %v180
      %v2035 = vunpack.c.l.b16 %v181
      %v2036 = vunpack.c.l.b16 %v182
      %v2037 = vunpack.c.l.b16 %v183
      %v2038 = vunpack.c.l.b16 %v184
      %v2039 = vunpack.c.l.b16 %v185
      %v2040 = vunpack.c.l.b16 %v186
      %v2041 = vunpack.c.l.b16 %v187
      %v2042 = vunpack.c.l.b16 %v188
      %v2043 = vunpack.c.l.b16 %v189
      %v2044 = vunpack.c.l.b16 %v190
      %v2045 = vunpack.c.l.b16 %v191
      %v2046 = vunpack.c.l.b16 %v192
      %v2047 = vunpack.c.l.b16 %v193
      %v2048 = vunpack.c.l.b16 %v194
      %v2049 = vunpack.c.l.b16 %v195
      %v2050 = vunpack.c.l.b16 %v196
      %v2051 = vunpack.c.l.b16 %v197
      %v2052 = vunpack.c.l.b16 %v198
      %v2053 = vunpack.c.l.b16 %v199
      %v2054 = vunpack.c.l.b16 %v200
      %v2055 = vunpack.c.l.b16 %v201
      %v2056 = vunpack.c.l.b16 %v202
      %v2057 = vunpack.c.l.b16 %v203
      %v2058 = vunpack.c.l.b16 %v204
      %v2059 = vunpack.c.l.b16 %v205
      %v2060 = vpack.c.b16 %v2029, %v2028
      %v2061 = vpack.c.b16 %v2031, %v2030
      %v2062 = vpack.c.b16 %v2033, %v2032
      %v2063 = vpack.c.b16 %v2035, %v2034
      %v2064 = vpack.c.b16 %v2037, %v2036
      %v2065 = vpack.c.b16 %v2039, %v2038
      %v2066 = vpack.c.b16 %v2041, %v2040
      %v2067 = vpack.c.b16 %v2043, %v2042
      %v2068 = vpack.c.b16 %v2045, %v2044
      %v2069 = vpack.c.b16 %v2047, %v2046
      %v2070 = vpack.c.b16 %v2049, %v2048
      %v2071 = vpack.c.b16 %v2051, %v2050
      %v2072 = vpack.c.b16 %v2053, %v2052
      %v2073 = vpack.c.b16 %v2055, %v2054
      %v2074 = vpack.c.b16 %v2057, %v2056
      %v2075 = vpack.c.b16 %v2059, %v2058
      %v2076 = vunpack.c.l.b16 %v238
      %v2077 = vunpack.c.l.b16 %v248
      %v2078 = vunpack.c.l.b16 %v262
      %v2079 = vunpack.c.l.b16 %v272
      %v2080 = vunpack.c.l.b16 %v286
      %v2081 = vunpack.c.l.b16 %v296
      %v2082 = vunpack.c.l.b16 %v310
      %v2083 = vunpack.c.l.b16 %v320
      %v2084 = vunpack.c.l.b16 %v334
      %v2085 = vunpack.c.l.b16 %v344
      %v2086 = vunpack.c.l.b16 %v358
      %v2087 = vunpack.c.l.b16 %v368
      %v2088 = vunpack.c.l.b16 %v382
      %v2089 = vunpack.c.l.b16 %v392
      %v2090 = vunpack.c.l.b16 %v406
      %v2091 = vunpack.c.l.b16 %v416
      %v2092 = vunpack.c.l.b16 %v430
      %v2093 = vunpack.c.l.b16 %v440
      %v2094 = vunpack.c.l.b16 %v454
      %v2095 = vunpack.c.l.b16 %v464
      %v2096 = vunpack.c.l.b16 %v478
      %v2097 = vunpack.c.l.b16 %v488
      %v2098 = vunpack.c.l.b16 %v502
      %v2099 = vunpack.c.l.b16 %v512
      %v2100 = vunpack.c.l.b16 %v526
      %v2101 = vunpack.c.l.b16 %v536
      %v2102 = vunpack.c.l.b16 %v550
      %v2103 = vunpack.c.l.b16 %v560
      %v2104 = vunpack.c.l.b16 %v574
      %v2105 = vunpack.c.l.b16 %v584
      %v2106 = vunpack.c.l.b16 %v598
      %v2107 = vunpack.c.l.b16 %v608
      %v2108 = vpack.c.b16 %v2077, %v2076
      %v2109 = vpack.c.b16 %v2079, %v2078
      %v2110 = vpack.c.b16 %v2081, %v2080
      %v2111 = vpack.c.b16 %v2083, %v2082
      %v2112 = vpack.c.b16 %v2085, %v2084
      %v2113 = vpack.c.b16 %v2087, %v2086
      %v2114 = vpack.c.b16 %v2089, %v2088
      %v2115 = vpack.c.b16 %v2091, %v2090
      %v2116 = vpack.c.b16 %v2093, %v2092
      %v2117 = vpack.c.b16 %v2095, %v2094
      %v2118 = vpack.c.b16 %v2097, %v2096
      %v2119 = vpack.c.b16 %v2099, %v2098
      %v2120 = vpack.c.b16 %v2101, %v2100
      %v2121 = vpack.c.b16 %v2103, %v2102
      %v2122 = vpack.c.b16 %v2105, %v2104
      %v2123 = vpack.c.b16 %v2107, %v2106
      %2124 = vrot.lane.b32.xlu0 %v2108, 4
      %v2125 = vpop.permute.xlu0 %2124
      %2126 = vrot.lane.b32.xlu0 %v2109, 4
      %v2127 = vpop.permute.xlu0 %2126
      %2128 = vrot.lane.b32.xlu0 %v2110, 4
      %v2129 = vpop.permute.xlu0 %2128
      %2130 = vrot.lane.b32.xlu0 %v2111, 4
      %v2131 = vpop.permute.xlu0 %2130
      %2132 = vrot.lane.b32.xlu0 %v2112, 4
      %v2133 = vpop.permute.xlu0 %2132
      %2134 = vrot.lane.b32.xlu0 %v2113, 4
      %v2135 = vpop.permute.xlu0 %2134
      %2136 = vrot.lane.b32.xlu0 %v2114, 4
      %v2137 = vpop.permute.xlu0 %2136
      %2138 = vrot.lane.b32.xlu0 %v2115, 4
      %v2139 = vpop.permute.xlu0 %2138
      %2140 = vrot.lane.b32.xlu0 %v2116, 4
      %v2141 = vpop.permute.xlu0 %2140
      %2142 = vrot.lane.b32.xlu0 %v2117, 4
      %v2143 = vpop.permute.xlu0 %2142
      %2144 = vrot.lane.b32.xlu0 %v2118, 4
      %v2145 = vpop.permute.xlu0 %2144
      %2146 = vrot.lane.b32.xlu0 %v2119, 4
      %v2147 = vpop.permute.xlu0 %2146
      %2148 = vrot.lane.b32.xlu0 %v2120, 4
      %v2149 = vpop.permute.xlu0 %2148
      %2150 = vrot.lane.b32.xlu0 %v2121, 4
      %v2151 = vpop.permute.xlu0 %2150
      %2152 = vrot.lane.b32.xlu0 %v2122, 4
      %v2153 = vpop.permute.xlu0 %2152
      %2154 = vrot.lane.b32.xlu0 %v2123, 4
      %v2155 = vpop.permute.xlu0 %2154
      %v2156 = vunpack.c.l.b16 %v679
      %v2157 = vunpack.c.l.b16 %v682
      %v2158 = vunpack.c.l.b16 %v686
      %v2159 = vunpack.c.l.b16 %v689
      %v2160 = vunpack.c.l.b16 %v693
      %v2161 = vunpack.c.l.b16 %v696
      %v2162 = vunpack.c.l.b16 %v700
      %v2163 = vunpack.c.l.b16 %v703
      %v2164 = vunpack.c.l.b16 %v707
      %v2165 = vunpack.c.l.b16 %v710
      %v2166 = vunpack.c.l.b16 %v714
      %v2167 = vunpack.c.l.b16 %v717
      %v2168 = vunpack.c.l.b16 %v721
      %v2169 = vunpack.c.l.b16 %v724
      %v2170 = vunpack.c.l.b16 %v728
      %v2171 = vunpack.c.l.b16 %v731
      %v2172 = vunpack.c.l.b16 %v735
      %v2173 = vunpack.c.l.b16 %v738
      %v2174 = vunpack.c.l.b16 %v742
      %v2175 = vunpack.c.l.b16 %v745
      %v2176 = vunpack.c.l.b16 %v749
      %v2177 = vunpack.c.l.b16 %v752
      %v2178 = vunpack.c.l.b16 %v756
      %v2179 = vunpack.c.l.b16 %v759
      %v2180 = vunpack.c.l.b16 %v763
      %v2181 = vunpack.c.l.b16 %v766
      %v2182 = vunpack.c.l.b16 %v770
      %v2183 = vunpack.c.l.b16 %v773
      %v2184 = vunpack.c.l.b16 %v777
      %v2185 = vunpack.c.l.b16 %v780
      %v2186 = vunpack.c.l.b16 %v784
      %v2187 = vunpack.c.l.b16 %v787
      %v2188 = vpack.c.b16 %v2157, %v2156
      %v2189 = vpack.c.b16 %v2159, %v2158
      %v2190 = vpack.c.b16 %v2161, %v2160
      %v2191 = vpack.c.b16 %v2163, %v2162
      %v2192 = vpack.c.b16 %v2165, %v2164
      %v2193 = vpack.c.b16 %v2167, %v2166
      %v2194 = vpack.c.b16 %v2169, %v2168
      %v2195 = vpack.c.b16 %v2171, %v2170
      %v2196 = vpack.c.b16 %v2173, %v2172
      %v2197 = vpack.c.b16 %v2175, %v2174
      %v2198 = vpack.c.b16 %v2177, %v2176
      %v2199 = vpack.c.b16 %v2179, %v2178
      %v2200 = vpack.c.b16 %v2181, %v2180
      %v2201 = vpack.c.b16 %v2183, %v2182
      %v2202 = vpack.c.b16 %v2185, %v2184
      %v2203 = vpack.c.b16 %v2187, %v2186
      %2204 = vrot.lane.b32.xlu0 %v2188, 8
      %v2205 = vpop.permute.xlu0 %2204
      %2206 = vrot.lane.b32.xlu0 %v2189, 8
      %v2207 = vpop.permute.xlu0 %2206
      %2208 = vrot.lane.b32.xlu0 %v2190, 8
      %v2209 = vpop.permute.xlu0 %2208
      %2210 = vrot.lane.b32.xlu0 %v2191, 8
      %v2211 = vpop.permute.xlu0 %2210
      %2212 = vrot.lane.b32.xlu0 %v2192, 8
      %v2213 = vpop.permute.xlu0 %2212
      %2214 = vrot.lane.b32.xlu0 %v2193, 8
      %v2215 = vpop.permute.xlu0 %2214
      %2216 = vrot.lane.b32.xlu0 %v2194, 8
      %v2217 = vpop.permute.xlu0 %2216
      %2218 = vrot.lane.b32.xlu0 %v2195, 8
      %v2219 = vpop.permute.xlu0 %2218
      %2220 = vrot.lane.b32.xlu0 %v2196, 8
      %v2221 = vpop.permute.xlu0 %2220
      %2222 = vrot.lane.b32.xlu0 %v2197, 8
      %v2223 = vpop.permute.xlu0 %2222
      %2224 = vrot.lane.b32.xlu0 %v2198, 8
      %v2225 = vpop.permute.xlu0 %2224
      %2226 = vrot.lane.b32.xlu0 %v2199, 8
      %v2227 = vpop.permute.xlu0 %2226
      %2228 = vrot.lane.b32.xlu0 %v2200, 8
      %v2229 = vpop.permute.xlu0 %2228
      %2230 = vrot.lane.b32.xlu0 %v2201, 8
      %v2231 = vpop.permute.xlu0 %2230
      %2232 = vrot.lane.b32.xlu0 %v2202, 8
      %v2233 = vpop.permute.xlu0 %2232
      %2234 = vrot.lane.b32.xlu0 %v2203, 8
      %v2235 = vpop.permute.xlu0 %2234
      %v2252 = vunpack.c.l.b16 %v792
      %v2253 = vunpack.c.l.b16 %v793
      %v2254 = vunpack.c.l.b16 %v794
      %v2255 = vunpack.c.l.b16 %v795
      %v2256 = vunpack.c.l.b16 %v796
      %v2257 = vunpack.c.l.b16 %v797
      %v2258 = vunpack.c.l.b16 %v798
      %v2259 = vunpack.c.l.b16 %v799
      %v2260 = vunpack.c.l.b16 %v800
      %v2261 = vunpack.c.l.b16 %v801
      %v2262 = vunpack.c.l.b16 %v802
      %v2263 = vunpack.c.l.b16 %v803
      %v2264 = vunpack.c.l.b16 %v804
      %v2265 = vunpack.c.l.b16 %v805
      %v2266 = vunpack.c.l.b16 %v806
      %v2267 = vunpack.c.l.b16 %v807
      %v2268 = vunpack.c.l.b16 %v808
      %v2269 = vunpack.c.l.b16 %v809
      %v2270 = vunpack.c.l.b16 %v810
      %v2271 = vunpack.c.l.b16 %v811
      %v2272 = vunpack.c.l.b16 %v812
      %v2273 = vunpack.c.l.b16 %v813
      %v2274 = vunpack.c.l.b16 %v814
      %v2275 = vunpack.c.l.b16 %v815
      %v2276 = vunpack.c.l.b16 %v816
      %v2277 = vunpack.c.l.b16 %v817
      %v2278 = vunpack.c.l.b16 %v818
      %v2279 = vunpack.c.l.b16 %v819
      %v2280 = vunpack.c.l.b16 %v820
      %v2281 = vunpack.c.l.b16 %v821
      %v2282 = vunpack.c.l.b16 %v822
      %v2283 = vunpack.c.l.b16 %v823
      %v2284 = vpack.c.b16 %v2253, %v2252
      %v2285 = vpack.c.b16 %v2255, %v2254
      %v2286 = vpack.c.b16 %v2257, %v2256
      %v2287 = vpack.c.b16 %v2259, %v2258
      %v2288 = vpack.c.b16 %v2261, %v2260
      %v2289 = vpack.c.b16 %v2263, %v2262
      %v2290 = vpack.c.b16 %v2265, %v2264
      %v2291 = vpack.c.b16 %v2267, %v2266
      %v2292 = vpack.c.b16 %v2269, %v2268
      %v2293 = vpack.c.b16 %v2271, %v2270
      %v2294 = vpack.c.b16 %v2273, %v2272
      %v2295 = vpack.c.b16 %v2275, %v2274
      %v2296 = vpack.c.b16 %v2277, %v2276
      %v2297 = vpack.c.b16 %v2279, %v2278
      %v2298 = vpack.c.b16 %v2281, %v2280
      %v2299 = vpack.c.b16 %v2283, %v2282
      %2300 = vrot.lane.b32.xlu0 %v2284, 12
      %v2301 = vpop.permute.xlu0 %2300
      %2302 = vrot.lane.b32.xlu0 %v2285, 12
      %v2303 = vpop.permute.xlu0 %2302
      %2304 = vrot.lane.b32.xlu0 %v2286, 12
      %v2305 = vpop.permute.xlu0 %2304
      %2306 = vrot.lane.b32.xlu0 %v2287, 12
      %v2307 = vpop.permute.xlu0 %2306
      %2308 = vrot.lane.b32.xlu0 %v2288, 12
      %v2309 = vpop.permute.xlu0 %2308
      %2310 = vrot.lane.b32.xlu0 %v2289, 12
      %v2311 = vpop.permute.xlu0 %2310
      %2312 = vrot.lane.b32.xlu0 %v2290, 12
      %v2313 = vpop.permute.xlu0 %2312
      %2314 = vrot.lane.b32.xlu0 %v2291, 12
      %v2315 = vpop.permute.xlu0 %2314
      %2316 = vrot.lane.b32.xlu0 %v2292, 12
      %v2317 = vpop.permute.xlu0 %2316
      %2318 = vrot.lane.b32.xlu0 %v2293, 12
      %v2319 = vpop.permute.xlu0 %2318
      %2320 = vrot.lane.b32.xlu0 %v2294, 12
      %v2321 = vpop.permute.xlu0 %2320
      %2322 = vrot.lane.b32.xlu0 %v2295, 12
      %v2323 = vpop.permute.xlu0 %2322
      %2324 = vrot.lane.b32.xlu0 %v2296, 12
      %v2325 = vpop.permute.xlu0 %2324
      %2326 = vrot.lane.b32.xlu0 %v2297, 12
      %v2327 = vpop.permute.xlu0 %2326
      %2328 = vrot.lane.b32.xlu0 %v2298, 12
      %v2329 = vpop.permute.xlu0 %2328
      %2330 = vrot.lane.b32.xlu0 %v2299, 12
      %v2331 = vpop.permute.xlu0 %2330
      %v2332 = vunpack.c.l.b16 %v853
      %v2333 = vunpack.c.l.b16 %v863
      %v2334 = vunpack.c.l.b16 %v877
      %v2335 = vunpack.c.l.b16 %v887
      %v2336 = vunpack.c.l.b16 %v901
      %v2337 = vunpack.c.l.b16 %v911
      %v2338 = vunpack.c.l.b16 %v925
      %v2339 = vunpack.c.l.b16 %v935
      %v2340 = vunpack.c.l.b16 %v949
      %v2341 = vunpack.c.l.b16 %v959
      %v2342 = vunpack.c.l.b16 %v973
      %v2343 = vunpack.c.l.b16 %v983
      %v2344 = vunpack.c.l.b16 %v997
      %v2345 = vunpack.c.l.b16 %v1007
      %v2346 = vunpack.c.l.b16 %v1021
      %v2347 = vunpack.c.l.b16 %v1031
      %v2348 = vunpack.c.l.b16 %v1045
      %v2349 = vunpack.c.l.b16 %v1055
      %v2350 = vunpack.c.l.b16 %v1069
      %v2351 = vunpack.c.l.b16 %v1079
      %v2352 = vunpack.c.l.b16 %v1093
      %v2353 = vunpack.c.l.b16 %v1103
      %v2354 = vunpack.c.l.b16 %v1117
      %v2355 = vunpack.c.l.b16 %v1127
      %v2356 = vunpack.c.l.b16 %v1141
      %v2357 = vunpack.c.l.b16 %v1151
      %v2358 = vunpack.c.l.b16 %v1165
      %v2359 = vunpack.c.l.b16 %v1175
      %v2360 = vunpack.c.l.b16 %v1189
      %v2361 = vunpack.c.l.b16 %v1199
      %v2362 = vunpack.c.l.b16 %v1213
      %v2363 = vunpack.c.l.b16 %v1223
      %v2364 = vpack.c.b16 %v2333, %v2332
      %v2365 = vpack.c.b16 %v2335, %v2334
      %v2366 = vpack.c.b16 %v2337, %v2336
      %v2367 = vpack.c.b16 %v2339, %v2338
      %v2368 = vpack.c.b16 %v2341, %v2340
      %v2369 = vpack.c.b16 %v2343, %v2342
      %v2370 = vpack.c.b16 %v2345, %v2344
      %v2371 = vpack.c.b16 %v2347, %v2346
      %v2372 = vpack.c.b16 %v2349, %v2348
      %v2373 = vpack.c.b16 %v2351, %v2350
      %v2374 = vpack.c.b16 %v2353, %v2352
      %v2375 = vpack.c.b16 %v2355, %v2354
      %v2376 = vpack.c.b16 %v2357, %v2356
      %v2377 = vpack.c.b16 %v2359, %v2358
      %v2378 = vpack.c.b16 %v2361, %v2360
      %v2379 = vpack.c.b16 %v2363, %v2362
      %2380 = vrot.lane.b32.xlu0 %v2364, 16
      %v2381 = vpop.permute.xlu0 %2380
      %2382 = vrot.lane.b32.xlu0 %v2365, 16
      %v2383 = vpop.permute.xlu0 %2382
      %2384 = vrot.lane.b32.xlu0 %v2366, 16
      %v2385 = vpop.permute.xlu0 %2384
      %2386 = vrot.lane.b32.xlu0 %v2367, 16
      %v2387 = vpop.permute.xlu0 %2386
      %2388 = vrot.lane.b32.xlu0 %v2368, 16
      %v2389 = vpop.permute.xlu0 %2388
      %2390 = vrot.lane.b32.xlu0 %v2369, 16
      %v2391 = vpop.permute.xlu0 %2390
      %2392 = vrot.lane.b32.xlu0 %v2370, 16
      %v2393 = vpop.permute.xlu0 %2392
      %2394 = vrot.lane.b32.xlu0 %v2371, 16
      %v2395 = vpop.permute.xlu0 %2394
      %2396 = vrot.lane.b32.xlu0 %v2372, 16
      %v2397 = vpop.permute.xlu0 %2396
      %2398 = vrot.lane.b32.xlu0 %v2373, 16
      %v2399 = vpop.permute.xlu0 %2398
      %2400 = vrot.lane.b32.xlu0 %v2374, 16
      %v2401 = vpop.permute.xlu0 %2400
      %2402 = vrot.lane.b32.xlu0 %v2375, 16
      %v2403 = vpop.permute.xlu0 %2402
      %2404 = vrot.lane.b32.xlu0 %v2376, 16
      %v2405 = vpop.permute.xlu0 %2404
      %2406 = vrot.lane.b32.xlu0 %v2377, 16
      %v2407 = vpop.permute.xlu0 %2406
      %2408 = vrot.lane.b32.xlu0 %v2378, 16
      %v2409 = vpop.permute.xlu0 %2408
      %2410 = vrot.lane.b32.xlu0 %v2379, 16
      %v2411 = vpop.permute.xlu0 %2410
      %v2412 = vunpack.c.l.b16 %v1291
      %v2413 = vunpack.c.l.b16 %v1294
      %v2414 = vunpack.c.l.b16 %v1298
      %v2415 = vunpack.c.l.b16 %v1301
      %v2416 = vunpack.c.l.b16 %v1305
      %v2417 = vunpack.c.l.b16 %v1308
      %v2418 = vunpack.c.l.b16 %v1312
      %v2419 = vunpack.c.l.b16 %v1315
      %v2420 = vunpack.c.l.b16 %v1319
      %v2421 = vunpack.c.l.b16 %v1322
      %v2422 = vunpack.c.l.b16 %v1326
      %v2423 = vunpack.c.l.b16 %v1329
      %v2424 = vunpack.c.l.b16 %v1333
      %v2425 = vunpack.c.l.b16 %v1336
      %v2426 = vunpack.c.l.b16 %v1340
      %v2427 = vunpack.c.l.b16 %v1343
      %v2428 = vunpack.c.l.b16 %v1347
      %v2429 = vunpack.c.l.b16 %v1350
      %v2430 = vunpack.c.l.b16 %v1354
      %v2431 = vunpack.c.l.b16 %v1357
      %v2432 = vunpack.c.l.b16 %v1361
      %v2433 = vunpack.c.l.b16 %v1364
      %v2434 = vunpack.c.l.b16 %v1368
      %v2435 = vunpack.c.l.b16 %v1371
      %v2436 = vunpack.c.l.b16 %v1375
      %v2437 = vunpack.c.l.b16 %v1378
      %v2438 = vunpack.c.l.b16 %v1382
      %v2439 = vunpack.c.l.b16 %v1385
      %v2440 = vunpack.c.l.b16 %v1389
      %v2441 = vunpack.c.l.b16 %v1392
      %v2442 = vunpack.c.l.b16 %v1396
      %v2443 = vunpack.c.l.b16 %v1399
      %v2444 = vpack.c.b16 %v2413, %v2412
      %v2445 = vpack.c.b16 %v2415, %v2414
      %v2446 = vpack.c.b16 %v2417, %v2416
      %v2447 = vpack.c.b16 %v2419, %v2418
      %v2448 = vpack.c.b16 %v2421, %v2420
      %v2449 = vpack.c.b16 %v2423, %v2422
      %v2450 = vpack.c.b16 %v2425, %v2424
      %v2451 = vpack.c.b16 %v2427, %v2426
      %v2452 = vpack.c.b16 %v2429, %v2428
      %v2453 = vpack.c.b16 %v2431, %v2430
      %v2454 = vpack.c.b16 %v2433, %v2432
      %v2455 = vpack.c.b16 %v2435, %v2434
      %v2456 = vpack.c.b16 %v2437, %v2436
      %v2457 = vpack.c.b16 %v2439, %v2438
      %v2458 = vpack.c.b16 %v2441, %v2440
      %v2459 = vpack.c.b16 %v2443, %v2442
      %2460 = vrot.lane.b32.xlu0 %v2444, 20
      %v2461 = vpop.permute.xlu0 %2460
      %2462 = vrot.lane.b32.xlu0 %v2445, 20
      %v2463 = vpop.permute.xlu0 %2462
      %2464 = vrot.lane.b32.xlu0 %v2446, 20
      %v2465 = vpop.permute.xlu0 %2464
      %2466 = vrot.lane.b32.xlu0 %v2447, 20
      %v2467 = vpop.permute.xlu0 %2466
      %2468 = vrot.lane.b32.xlu0 %v2448, 20
      %v2469 = vpop.permute.xlu0 %2468
      %2470 = vrot.lane.b32.xlu0 %v2449, 20
      %v2471 = vpop.permute.xlu0 %2470
      %2472 = vrot.lane.b32.xlu0 %v2450, 20
      %v2473 = vpop.permute.xlu0 %2472
      %2474 = vrot.lane.b32.xlu0 %v2451, 20
      %v2475 = vpop.permute.xlu0 %2474
      %2476 = vrot.lane.b32.xlu0 %v2452, 20
      %v2477 = vpop.permute.xlu0 %2476
      %2478 = vrot.lane.b32.xlu0 %v2453, 20
      %v2479 = vpop.permute.xlu0 %2478
      %2480 = vrot.lane.b32.xlu0 %v2454, 20
      %v2481 = vpop.permute.xlu0 %2480
      %2482 = vrot.lane.b32.xlu0 %v2455, 20
      %v2483 = vpop.permute.xlu0 %2482
      %2484 = vrot.lane.b32.xlu0 %v2456, 20
      %v2485 = vpop.permute.xlu0 %2484
      %2486 = vrot.lane.b32.xlu0 %v2457, 20
      %v2487 = vpop.permute.xlu0 %2486
      %2488 = vrot.lane.b32.xlu0 %v2458, 20
      %v2489 = vpop.permute.xlu0 %2488
      %2490 = vrot.lane.b32.xlu0 %v2459, 20
      %v2491 = vpop.permute.xlu0 %2490
      %v2508 = vunpack.c.l.b16 %v1404
      %v2509 = vunpack.c.l.b16 %v1405
      %v2510 = vunpack.c.l.b16 %v1406
      %v2511 = vunpack.c.l.b16 %v1407
      %v2512 = vunpack.c.l.b16 %v1408
      %v2513 = vunpack.c.l.b16 %v1409
      %v2514 = vunpack.c.l.b16 %v1410
      %v2515 = vunpack.c.l.b16 %v1411
      %v2516 = vunpack.c.l.b16 %v1412
      %v2517 = vunpack.c.l.b16 %v1413
      %v2518 = vunpack.c.l.b16 %v1414
      %v2519 = vunpack.c.l.b16 %v1415
      %v2520 = vunpack.c.l.b16 %v1416
      %v2521 = vunpack.c.l.b16 %v1417
      %v2522 = vunpack.c.l.b16 %v1418
      %v2523 = vunpack.c.l.b16 %v1419
      %v2524 = vunpack.c.l.b16 %v1420
      %v2525 = vunpack.c.l.b16 %v1421
      %v2526 = vunpack.c.l.b16 %v1422
      %v2527 = vunpack.c.l.b16 %v1423
      %v2528 = vunpack.c.l.b16 %v1424
      %v2529 = vunpack.c.l.b16 %v1425
      %v2530 = vunpack.c.l.b16 %v1426
      %v2531 = vunpack.c.l.b16 %v1427
      %v2532 = vunpack.c.l.b16 %v1428
      %v2533 = vunpack.c.l.b16 %v1429
      %v2534 = vunpack.c.l.b16 %v1430
      %v2535 = vunpack.c.l.b16 %v1431
      %v2536 = vunpack.c.l.b16 %v1432
      %v2537 = vunpack.c.l.b16 %v1433
      %v2538 = vunpack.c.l.b16 %v1434
      %v2539 = vunpack.c.l.b16 %v1435
      %v2540 = vpack.c.b16 %v2509, %v2508
      %v2541 = vpack.c.b16 %v2511, %v2510
      %v2542 = vpack.c.b16 %v2513, %v2512
      %v2543 = vpack.c.b16 %v2515, %v2514
      %v2544 = vpack.c.b16 %v2517, %v2516
      %v2545 = vpack.c.b16 %v2519, %v2518
      %v2546 = vpack.c.b16 %v2521, %v2520
      %v2547 = vpack.c.b16 %v2523, %v2522
      %v2548 = vpack.c.b16 %v2525, %v2524
      %v2549 = vpack.c.b16 %v2527, %v2526
      %v2550 = vpack.c.b16 %v2529, %v2528
      %v2551 = vpack.c.b16 %v2531, %v2530
      %v2552 = vpack.c.b16 %v2533, %v2532
      %v2553 = vpack.c.b16 %v2535, %v2534
      %v2554 = vpack.c.b16 %v2537, %v2536
      %v2555 = vpack.c.b16 %v2539, %v2538
      %2556 = vrot.lane.b32.xlu0 %v2540, 24
      %v2557 = vpop.permute.xlu0 %2556
      %2558 = vrot.lane.b32.xlu0 %v2541, 24
      %v2559 = vpop.permute.xlu0 %2558
      %2560 = vrot.lane.b32.xlu0 %v2542, 24
      %v2561 = vpop.permute.xlu0 %2560
      %2562 = vrot.lane.b32.xlu0 %v2543, 24
      %v2563 = vpop.permute.xlu0 %2562
      %2564 = vrot.lane.b32.xlu0 %v2544, 24
      %v2565 = vpop.permute.xlu0 %2564
      %2566 = vrot.lane.b32.xlu0 %v2545, 24
      %v2567 = vpop.permute.xlu0 %2566
      %2568 = vrot.lane.b32.xlu0 %v2546, 24
      %v2569 = vpop.permute.xlu0 %2568
      %2570 = vrot.lane.b32.xlu0 %v2547, 24
      %v2571 = vpop.permute.xlu0 %2570
      %2572 = vrot.lane.b32.xlu0 %v2548, 24
      %v2573 = vpop.permute.xlu0 %2572
      %2574 = vrot.lane.b32.xlu0 %v2549, 24
      %v2575 = vpop.permute.xlu0 %2574
      %2576 = vrot.lane.b32.xlu0 %v2550, 24
      %v2577 = vpop.permute.xlu0 %2576
      %2578 = vrot.lane.b32.xlu0 %v2551, 24
      %v2579 = vpop.permute.xlu0 %2578
      %2580 = vrot.lane.b32.xlu0 %v2552, 24
      %v2581 = vpop.permute.xlu0 %2580
      %2582 = vrot.lane.b32.xlu0 %v2553, 24
      %v2583 = vpop.permute.xlu0 %2582
      %2584 = vrot.lane.b32.xlu0 %v2554, 24
      %v2585 = vpop.permute.xlu0 %2584
      %2586 = vrot.lane.b32.xlu0 %v2555, 24
      %v2587 = vpop.permute.xlu0 %2586
      %v2588 = vunpack.c.l.b16 %v1465
      %v2589 = vunpack.c.l.b16 %v1475
      %v2590 = vunpack.c.l.b16 %v1489
      %v2591 = vunpack.c.l.b16 %v1499
      %v2592 = vunpack.c.l.b16 %v1513
      %v2593 = vunpack.c.l.b16 %v1523
      %v2594 = vunpack.c.l.b16 %v1537
      %v2595 = vunpack.c.l.b16 %v1547
      %v2596 = vunpack.c.l.b16 %v1561
      %v2597 = vunpack.c.l.b16 %v1571
      %v2598 = vunpack.c.l.b16 %v1585
      %v2599 = vunpack.c.l.b16 %v1595
      %v2600 = vunpack.c.l.b16 %v1609
      %v2601 = vunpack.c.l.b16 %v1619
      %v2602 = vunpack.c.l.b16 %v1633
      %v2603 = vunpack.c.l.b16 %v1643
      %v2604 = vunpack.c.l.b16 %v1657
      %v2605 = vunpack.c.l.b16 %v1667
      %v2606 = vunpack.c.l.b16 %v1681
      %v2607 = vunpack.c.l.b16 %v1691
      %v2608 = vunpack.c.l.b16 %v1705
      %v2609 = vunpack.c.l.b16 %v1715
      %v2610 = vunpack.c.l.b16 %v1729
      %v2611 = vunpack.c.l.b16 %v1739
      %v2612 = vunpack.c.l.b16 %v1753
      %v2613 = vunpack.c.l.b16 %v1763
      %v2614 = vunpack.c.l.b16 %v1777
      %v2615 = vunpack.c.l.b16 %v1787
      %v2616 = vunpack.c.l.b16 %v1801
      %v2617 = vunpack.c.l.b16 %v1811
      %v2618 = vunpack.c.l.b16 %v1825
      %v2619 = vunpack.c.l.b16 %v1835
      %v2620 = vpack.c.b16 %v2589, %v2588
      %v2621 = vpack.c.b16 %v2591, %v2590
      %v2622 = vpack.c.b16 %v2593, %v2592
      %v2623 = vpack.c.b16 %v2595, %v2594
      %v2624 = vpack.c.b16 %v2597, %v2596
      %v2625 = vpack.c.b16 %v2599, %v2598
      %v2626 = vpack.c.b16 %v2601, %v2600
      %v2627 = vpack.c.b16 %v2603, %v2602
      %v2628 = vpack.c.b16 %v2605, %v2604
      %v2629 = vpack.c.b16 %v2607, %v2606
      %v2630 = vpack.c.b16 %v2609, %v2608
      %v2631 = vpack.c.b16 %v2611, %v2610
      %v2632 = vpack.c.b16 %v2613, %v2612
      %v2633 = vpack.c.b16 %v2615, %v2614
      %v2634 = vpack.c.b16 %v2617, %v2616
      %v2635 = vpack.c.b16 %v2619, %v2618
      %2636 = vrot.lane.b32.xlu0 %v2620, 28
      %v2637 = vpop.permute.xlu0 %2636
      %2638 = vrot.lane.b32.xlu0 %v2621, 28
      %v2639 = vpop.permute.xlu0 %2638
      %2640 = vrot.lane.b32.xlu0 %v2622, 28
      %v2641 = vpop.permute.xlu0 %2640
      %2642 = vrot.lane.b32.xlu0 %v2623, 28
      %v2643 = vpop.permute.xlu0 %2642
      %2644 = vrot.lane.b32.xlu0 %v2624, 28
      %v2645 = vpop.permute.xlu0 %2644
      %2646 = vrot.lane.b32.xlu0 %v2625, 28
      %v2647 = vpop.permute.xlu0 %2646
      %2648 = vrot.lane.b32.xlu0 %v2626, 28
      %v2649 = vpop.permute.xlu0 %2648
      %2650 = vrot.lane.b32.xlu0 %v2627, 28
      %v2651 = vpop.permute.xlu0 %2650
      %2652 = vrot.lane.b32.xlu0 %v2628, 28
      %v2653 = vpop.permute.xlu0 %2652
      %2654 = vrot.lane.b32.xlu0 %v2629, 28
      %v2655 = vpop.permute.xlu0 %2654
      %2656 = vrot.lane.b32.xlu0 %v2630, 28
      %v2657 = vpop.permute.xlu0 %2656
      %2658 = vrot.lane.b32.xlu0 %v2631, 28
      %v2659 = vpop.permute.xlu0 %2658
      %2660 = vrot.lane.b32.xlu0 %v2632, 28
      %v2661 = vpop.permute.xlu0 %2660
      %2662 = vrot.lane.b32.xlu0 %v2633, 28
      %v2663 = vpop.permute.xlu0 %2662
      %2664 = vrot.lane.b32.xlu0 %v2634, 28
      %v2665 = vpop.permute.xlu0 %2664
      %2666 = vrot.lane.b32.xlu0 %v2635, 28
      %v2667 = vpop.permute.xlu0 %2666
      %v2668 = vunpack.c.l.b16 %v1903
      %v2669 = vunpack.c.l.b16 %v1906
      %v2670 = vunpack.c.l.b16 %v1910
      %v2671 = vunpack.c.l.b16 %v1913
      %v2672 = vunpack.c.l.b16 %v1917
      %v2673 = vunpack.c.l.b16 %v1920
      %v2674 = vunpack.c.l.b16 %v1924
      %v2675 = vunpack.c.l.b16 %v1927
      %v2676 = vunpack.c.l.b16 %v1931
      %v2677 = vunpack.c.l.b16 %v1934
      %v2678 = vunpack.c.l.b16 %v1938
      %v2679 = vunpack.c.l.b16 %v1941
      %v2680 = vunpack.c.l.b16 %v1945
      %v2681 = vunpack.c.l.b16 %v1948
      %v2682 = vunpack.c.l.b16 %v1952
      %v2683 = vunpack.c.l.b16 %v1955
      %v2684 = vunpack.c.l.b16 %v1959
      %v2685 = vunpack.c.l.b16 %v1962
      %v2686 = vunpack.c.l.b16 %v1966
      %v2687 = vunpack.c.l.b16 %v1969
      %v2688 = vunpack.c.l.b16 %v1973
      %v2689 = vunpack.c.l.b16 %v1976
      %v2690 = vunpack.c.l.b16 %v1980
      %v2691 = vunpack.c.l.b16 %v1983
      %v2692 = vunpack.c.l.b16 %v1987
      %v2693 = vunpack.c.l.b16 %v1990
      %v2694 = vunpack.c.l.b16 %v1994
      %v2695 = vunpack.c.l.b16 %v1997
      %v2696 = vunpack.c.l.b16 %v2001
      %v2697 = vunpack.c.l.b16 %v2004
      %v2698 = vunpack.c.l.b16 %v2008
      %v2699 = vunpack.c.l.b16 %v2011
      %v2700 = vpack.c.b16 %v2669, %v2668
      %v2701 = vpack.c.b16 %v2671, %v2670
      %v2702 = vpack.c.b16 %v2673, %v2672
      %v2703 = vpack.c.b16 %v2675, %v2674
      %v2704 = vpack.c.b16 %v2677, %v2676
      %v2705 = vpack.c.b16 %v2679, %v2678
      %v2706 = vpack.c.b16 %v2681, %v2680
      %v2707 = vpack.c.b16 %v2683, %v2682
      %v2708 = vpack.c.b16 %v2685, %v2684
      %v2709 = vpack.c.b16 %v2687, %v2686
      %v2710 = vpack.c.b16 %v2689, %v2688
      %v2711 = vpack.c.b16 %v2691, %v2690
      %v2712 = vpack.c.b16 %v2693, %v2692
      %v2713 = vpack.c.b16 %v2695, %v2694
      %v2714 = vpack.c.b16 %v2697, %v2696
      %v2715 = vpack.c.b16 %v2699, %v2698
      %2716 = vrot.lane.b32.xlu0 %v2700, 32
      %v2717 = vpop.permute.xlu0 %2716
      %2718 = vrot.lane.b32.xlu0 %v2701, 32
      %v2719 = vpop.permute.xlu0 %2718
      %2720 = vrot.lane.b32.xlu0 %v2702, 32
      %v2721 = vpop.permute.xlu0 %2720
      %2722 = vrot.lane.b32.xlu0 %v2703, 32
      %v2723 = vpop.permute.xlu0 %2722
      %2724 = vrot.lane.b32.xlu0 %v2704, 32
      %v2725 = vpop.permute.xlu0 %2724
      %2726 = vrot.lane.b32.xlu0 %v2705, 32
      %v2727 = vpop.permute.xlu0 %2726
      %2728 = vrot.lane.b32.xlu0 %v2706, 32
      %v2729 = vpop.permute.xlu0 %2728
      %2730 = vrot.lane.b32.xlu0 %v2707, 32
      %v2731 = vpop.permute.xlu0 %2730
      %2732 = vrot.lane.b32.xlu0 %v2708, 32
      %v2733 = vpop.permute.xlu0 %2732
      %2734 = vrot.lane.b32.xlu0 %v2709, 32
      %v2735 = vpop.permute.xlu0 %2734
      %2736 = vrot.lane.b32.xlu0 %v2710, 32
      %v2737 = vpop.permute.xlu0 %2736
      %2738 = vrot.lane.b32.xlu0 %v2711, 32
      %v2739 = vpop.permute.xlu0 %2738
      %2740 = vrot.lane.b32.xlu0 %v2712, 32
      %v2741 = vpop.permute.xlu0 %2740
      %2742 = vrot.lane.b32.xlu0 %v2713, 32
      %v2743 = vpop.permute.xlu0 %2742
      %2744 = vrot.lane.b32.xlu0 %v2714, 32
      %v2745 = vpop.permute.xlu0 %2744
      %2746 = vrot.lane.b32.xlu0 %v2715, 32
      %v2747 = vpop.permute.xlu0 %2746
      %vm2748 = vcmask 31744
      %v2751 = vsel %vm2748, %v2060, %v2125
      %v2754 = vsel %vm2748, %v2061, %v2127
      %v2757 = vsel %vm2748, %v2062, %v2129
      %v2760 = vsel %vm2748, %v2063, %v2131
      %v2763 = vsel %vm2748, %v2064, %v2133
      %v2766 = vsel %vm2748, %v2065, %v2135
      %v2769 = vsel %vm2748, %v2066, %v2137
      %v2772 = vsel %vm2748, %v2067, %v2139
      %v2775 = vsel %vm2748, %v2068, %v2141
      %v2778 = vsel %vm2748, %v2069, %v2143
      %v2781 = vsel %vm2748, %v2070, %v2145
      %v2784 = vsel %vm2748, %v2071, %v2147
      %v2787 = vsel %vm2748, %v2072, %v2149
      %v2790 = vsel %vm2748, %v2073, %v2151
      %v2793 = vsel %vm2748, %v2074, %v2153
      %v2796 = vsel %vm2748, %v2075, %v2155
      %vm2797 = vcmask 64512
      %v2799 = vsel %vm2797, %v2751, %v2205
      %v2801 = vsel %vm2797, %v2754, %v2207
      %v2803 = vsel %vm2797, %v2757, %v2209
      %v2805 = vsel %vm2797, %v2760, %v2211
      %v2807 = vsel %vm2797, %v2763, %v2213
      %v2809 = vsel %vm2797, %v2766, %v2215
      %v2811 = vsel %vm2797, %v2769, %v2217
      %v2813 = vsel %vm2797, %v2772, %v2219
      %v2815 = vsel %vm2797, %v2775, %v2221
      %v2817 = vsel %vm2797, %v2778, %v2223
      %v2819 = vsel %vm2797, %v2781, %v2225
      %v2821 = vsel %vm2797, %v2784, %v2227
      %v2823 = vsel %vm2797, %v2787, %v2229
      %v2825 = vsel %vm2797, %v2790, %v2231
      %v2827 = vsel %vm2797, %v2793, %v2233
      %v2829 = vsel %vm2797, %v2796, %v2235
      %vm2830 = vcmask 97280
      %v2832 = vsel %vm2830, %v2799, %v2301
      %v2834 = vsel %vm2830, %v2801, %v2303
      %v2836 = vsel %vm2830, %v2803, %v2305
      %v2838 = vsel %vm2830, %v2805, %v2307
      %v2840 = vsel %vm2830, %v2807, %v2309
      %v2842 = vsel %vm2830, %v2809, %v2311
      %v2844 = vsel %vm2830, %v2811, %v2313
      %v2846 = vsel %vm2830, %v2813, %v2315
      %v2848 = vsel %vm2830, %v2815, %v2317
      %v2850 = vsel %vm2830, %v2817, %v2319
      %v2852 = vsel %vm2830, %v2819, %v2321
      %v2854 = vsel %vm2830, %v2821, %v2323
      %v2856 = vsel %vm2830, %v2823, %v2325
      %v2858 = vsel %vm2830, %v2825, %v2327
      %v2860 = vsel %vm2830, %v2827, %v2329
      %v2862 = vsel %vm2830, %v2829, %v2331
      %vm2863 = vcmask 130048
      %v2865 = vsel %vm2863, %v2832, %v2381
      %v2867 = vsel %vm2863, %v2834, %v2383
      %v2869 = vsel %vm2863, %v2836, %v2385
      %v2871 = vsel %vm2863, %v2838, %v2387
      %v2873 = vsel %vm2863, %v2840, %v2389
      %v2875 = vsel %vm2863, %v2842, %v2391
      %v2877 = vsel %vm2863, %v2844, %v2393
      %v2879 = vsel %vm2863, %v2846, %v2395
      %v2881 = vsel %vm2863, %v2848, %v2397
      %v2883 = vsel %vm2863, %v2850, %v2399
      %v2885 = vsel %vm2863, %v2852, %v2401
      %v2887 = vsel %vm2863, %v2854, %v2403
      %v2889 = vsel %vm2863, %v2856, %v2405
      %v2891 = vsel %vm2863, %v2858, %v2407
      %v2893 = vsel %vm2863, %v2860, %v2409
      %v2895 = vsel %vm2863, %v2862, %v2411
      %vm2896 = vcmask 162816
      %v2898 = vsel %vm2896, %v2865, %v2461
      %v2900 = vsel %vm2896, %v2867, %v2463
      %v2902 = vsel %vm2896, %v2869, %v2465
      %v2904 = vsel %vm2896, %v2871, %v2467
      %v2906 = vsel %vm2896, %v2873, %v2469
      %v2908 = vsel %vm2896, %v2875, %v2471
      %v2910 = vsel %vm2896, %v2877, %v2473
      %v2912 = vsel %vm2896, %v2879, %v2475
      %v2914 = vsel %vm2896, %v2881, %v2477
      %v2916 = vsel %vm2896, %v2883, %v2479
      %v2918 = vsel %vm2896, %v2885, %v2481
      %v2920 = vsel %vm2896, %v2887, %v2483
      %v2922 = vsel %vm2896, %v2889, %v2485
      %v2924 = vsel %vm2896, %v2891, %v2487
      %v2926 = vsel %vm2896, %v2893, %v2489
      %v2928 = vsel %vm2896, %v2895, %v2491
      %vm2929 = vcmask 195584
      %v2931 = vsel %vm2929, %v2898, %v2557
      %v2933 = vsel %vm2929, %v2900, %v2559
      %v2935 = vsel %vm2929, %v2902, %v2561
      %v2937 = vsel %vm2929, %v2904, %v2563
      %v2939 = vsel %vm2929, %v2906, %v2565
      %v2941 = vsel %vm2929, %v2908, %v2567
      %v2943 = vsel %vm2929, %v2910, %v2569
      %v2945 = vsel %vm2929, %v2912, %v2571
      %v2947 = vsel %vm2929, %v2914, %v2573
      %v2949 = vsel %vm2929, %v2916, %v2575
      %v2951 = vsel %vm2929, %v2918, %v2577
      %v2953 = vsel %vm2929, %v2920, %v2579
      %v2955 = vsel %vm2929, %v2922, %v2581
      %v2957 = vsel %vm2929, %v2924, %v2583
      %v2959 = vsel %vm2929, %v2926, %v2585
      %v2961 = vsel %vm2929, %v2928, %v2587
      %vm2962 = vcmask 228352
      %v2964 = vsel %vm2962, %v2931, %v2637
      %v2966 = vsel %vm2962, %v2933, %v2639
      %v2968 = vsel %vm2962, %v2935, %v2641
      %v2970 = vsel %vm2962, %v2937, %v2643
      %v2972 = vsel %vm2962, %v2939, %v2645
      %v2974 = vsel %vm2962, %v2941, %v2647
      %v2976 = vsel %vm2962, %v2943, %v2649
      %v2978 = vsel %vm2962, %v2945, %v2651
      %v2980 = vsel %vm2962, %v2947, %v2653
      %v2982 = vsel %vm2962, %v2949, %v2655
      %v2984 = vsel %vm2962, %v2951, %v2657
      %v2986 = vsel %vm2962, %v2953, %v2659
      %v2988 = vsel %vm2962, %v2955, %v2661
      %v2990 = vsel %vm2962, %v2957, %v2663
      %v2992 = vsel %vm2962, %v2959, %v2665
      %v2994 = vsel %vm2962, %v2961, %v2667
      %vm2995 = vcmask 261120
      %v2997 = vsel %vm2995, %v2964, %v2717
      %v2999 = vsel %vm2995, %v2966, %v2719
      %v3001 = vsel %vm2995, %v2968, %v2721
      %v3003 = vsel %vm2995, %v2970, %v2723
      %v3005 = vsel %vm2995, %v2972, %v2725
      %v3007 = vsel %vm2995, %v2974, %v2727
      %v3009 = vsel %vm2995, %v2976, %v2729
      %v3011 = vsel %vm2995, %v2978, %v2731
      %v3013 = vsel %vm2995, %v2980, %v2733
      %v3015 = vsel %vm2995, %v2982, %v2735
      %v3017 = vsel %vm2995, %v2984, %v2737
      %v3019 = vsel %vm2995, %v2986, %v2739
      %v3021 = vsel %vm2995, %v2988, %v2741
      %v3023 = vsel %vm2995, %v2990, %v2743
      %v3025 = vsel %vm2995, %v2992, %v2745
      %v3027 = vsel %vm2995, %v2994, %v2747
      %v3028 = vld [vmem:[%s1] sm:$0xf]
      %v3029 = vld [vmem:[%s1 + $0x4] sm:$0xf]
      %v3030 = vld [vmem:[%s1 + $0x8] sm:$0xf]
      %v3031 = vld [vmem:[%s1 + $0xc] sm:$0xf]
      %v3032 = vld [vmem:[%s1 + $0x10] sm:$0x3]
      %v3038 = vunpack.c.l.b16 %v3028
      %v3039 = vunpack.c.l.b16 %v3029
      %v3040 = vunpack.c.l.b16 %v3030
      %v3041 = vunpack.c.l.b16 %v3031
      %v3042 = vunpack.c.l.b16 %v3032
      %v3043 = vpack.c.b16 %v3039, %v3038
      %v3044 = vpack.c.b16 %v3041, %v3040
      %v3045 = vpack.c.b16 %v3042, %v3042
      %vm3048 = vcmask 293888
      %v3049 = vsel %vm3048, %v2997, 0
      %v3051 = vsel %vm3048, %v2999, 0
      %v3053 = vsel %vm3048, %v3001, 0
      %v3055 = vsel %vm3048, %v3003, 0
      %v3057 = vsel %vm3048, %v3005, 0
      %v3059 = vsel %vm3048, %v3007, 0
      %v3061 = vsel %vm3048, %v3009, 0
      %v3063 = vsel %vm3048, %v3011, 0
      %v3065 = vsel %vm3048, %v3013, 0
      %v3067 = vsel %vm3048, %v3015, 0
      %v3069 = vsel %vm3048, %v3017, 0
      %v3071 = vsel %vm3048, %v3019, 0
      %v3073 = vsel %vm3048, %v3021, 0
      %v3075 = vsel %vm3048, %v3023, 0
      %v3077 = vsel %vm3048, %v3025, 0
      %v3079 = vsel %vm3048, %v3027, 0
      %vm3081 = vcmask 1041408
      %v3083 = vsel %vm3081, %v3045, 0
      %3085 = vmatprep.subr.bf16.mxu0 0
      %3086 = vmatpush1.bf16.msra.mxu0 %v3043
      %3087 = vmatprep.subr.bf16.mxu0 0
      %3088 = vmatpush1.bf16.msra.mxu0 %v3044
      %3089 = vmatprep.subr.bf16.mxu0 0
      %3090 = vmatpush1.bf16.msra.mxu0 %v3083
      %3091 = vmatprep.subr.bf16.mxu0 0
      %3092 = vmatpush1.bf16.msra.mxu0 0
      %3093 = vmatprep.subr.bf16.mxu0 0
      %3094 = vmatpush1.bf16.msra.mxu0 0
      %3095 = vmatprep.subr.bf16.mxu0 0
      %3096 = vmatpush1.bf16.msra.mxu0 0
      %3097 = vmatprep.subr.bf16.mxu0 0
      %3098 = vmatpush1.bf16.msra.mxu0 0
      %3099 = vmatprep.subr.bf16.mxu0 0
      %3100 = vmatpush1.bf16.msra.mxu0 0
      %3101 = vmatprep.subr.bf16.mxu0 0
      %3102 = vmatpush1.bf16.msra.mxu0 0
      %3103 = vmatprep.subr.bf16.mxu0 0
      %3104 = vmatpush1.bf16.msra.mxu0 0
      %3105 = vmatprep.subr.bf16.mxu0 0
      %3106 = vmatpush1.bf16.msra.mxu0 0
      %3107 = vmatprep.subr.bf16.mxu0 0
      %3108 = vmatpush1.bf16.msra.mxu0 0
      %3109 = vmatprep.subr.bf16.mxu0 0
      %3110 = vmatpush1.bf16.msra.mxu0 0
      %3111 = vmatprep.subr.bf16.mxu0 0
      %3112 = vmatpush1.bf16.msra.mxu0 0
      %3113 = vmatprep.subr.bf16.mxu0 0
      %3114 = vmatpush1.bf16.msra.mxu0 0
      %3115 = vmatprep.subr.bf16.mxu0 0
      %3116 = vmatpush1.bf16.msra.mxu0 0
      %3117 = vmatprep.mubr.bf16.mxu0 0
      %3118 = vmatmul.mubr.bf16.gmra.mrb[0].mxu0 %v3049
      %v3119 = vpop.f32.mrb[0].mxu0
      %v3120 = vadd.f32 0.0, %v3119
      %v3121 = vpop.f32.mrb[0].mxu0
      %v3122 = vpop.f32.mrb[0].mxu0
      %v3123 = vadd.f32 0.0, %v3122
      %v3124 = vpop.f32.mrb[0].mxu0
      %3125 = vmatprep.mubr.bf16.mxu0 0
      %3126 = vmatmul.mubr.bf16.gmra.mrb[0].mxu0 %v3051
      %v3127 = vpop.f32.mrb[0].mxu0
      %v3128 = vadd.f32 0.0, %v3127
      %v3129 = vpop.f32.mrb[0].mxu0
      %v3130 = vpop.f32.mrb[0].mxu0
      %v3131 = vadd.f32 0.0, %v3130
      %v3132 = vpop.f32.mrb[0].mxu0
      %3133 = vmatprep.mubr.bf16.mxu0 0
      %3134 = vmatmul.mubr.bf16.gmra.mrb[0].mxu0 %v3053
      %v3135 = vpop.f32.mrb[0].mxu0
      %v3136 = vadd.f32 0.0, %v3135
      %v3137 = vpop.f32.mrb[0].mxu0
      %v3138 = vpop.f32.mrb[0].mxu0
      %v3139 = vadd.f32 0.0, %v3138
      %v3140 = vpop.f32.mrb[0].mxu0
      %3141 = vmatprep.mubr.bf16.mxu0 0
      %3142 = vmatmul.mubr.bf16.gmra.mrb[0].mxu0 %v3055
      %v3143 = vpop.f32.mrb[0].mxu0
      %v3144 = vadd.f32 0.0, %v3143
      %v3145 = vpop.f32.mrb[0].mxu0
      %v3146 = vpop.f32.mrb[0].mxu0
      %v3147 = vadd.f32 0.0, %v3146
      %v3148 = vpop.f32.mrb[0].mxu0
      %3149 = vmatprep.mubr.bf16.mxu0 0
      %3150 = vmatmul.mubr.bf16.gmra.mrb[0].mxu0 %v3057
      %v3151 = vpop.f32.mrb[0].mxu0
      %v3152 = vadd.f32 0.0, %v3151
      %v3153 = vpop.f32.mrb[0].mxu0
      %v3154 = vpop.f32.mrb[0].mxu0
      %v3155 = vadd.f32 0.0, %v3154
      %v3156 = vpop.f32.mrb[0].mxu0
      %3157 = vmatprep.mubr.bf16.mxu0 0
      %3158 = vmatmul.mubr.bf16.gmra.mrb[0].mxu0 %v3059
      %v3159 = vpop.f32.mrb[0].mxu0
      %v3160 = vadd.f32 0.0, %v3159
      %v3161 = vpop.f32.mrb[0].mxu0
      %v3162 = vpop.f32.mrb[0].mxu0
      %v3163 = vadd.f32 0.0, %v3162
      %v3164 = vpop.f32.mrb[0].mxu0
      %3165 = vmatprep.mubr.bf16.mxu0 0
      %3166 = vmatmul.mubr.bf16.gmra.mrb[0].mxu0 %v3061
      %v3167 = vpop.f32.mrb[0].mxu0
      %v3168 = vadd.f32 0.0, %v3167
      %v3169 = vpop.f32.mrb[0].mxu0
      %v3170 = vpop.f32.mrb[0].mxu0
      %v3171 = vadd.f32 0.0, %v3170
      %v3172 = vpop.f32.mrb[0].mxu0
      %3173 = vmatprep.mubr.bf16.mxu0 0
      %3174 = vmatmul.mubr.bf16.gmra.mrb[0].mxu0 %v3063
      %v3175 = vpop.f32.mrb[0].mxu0
      %v3176 = vadd.f32 0.0, %v3175
      %v3177 = vpop.f32.mrb[0].mxu0
      %v3178 = vpop.f32.mrb[0].mxu0
      %v3179 = vadd.f32 0.0, %v3178
      %v3180 = vpop.f32.mrb[0].mxu0
      %3181 = vmatprep.mubr.bf16.mxu0 0
      %3182 = vmatmul.mubr.bf16.gmra.mrb[0].mxu0 %v3065
      %v3183 = vpop.f32.mrb[0].mxu0
      %v3184 = vadd.f32 0.0, %v3183
      %v3185 = vpop.f32.mrb[0].mxu0
      %v3186 = vpop.f32.mrb[0].mxu0
      %v3187 = vadd.f32 0.0, %v3186
      %v3188 = vpop.f32.mrb[0].mxu0
      %3189 = vmatprep.mubr.bf16.mxu0 0
      %3190 = vmatmul.mubr.bf16.gmra.mrb[0].mxu0 %v3067
      %v3191 = vpop.f32.mrb[0].mxu0
      %v3192 = vadd.f32 0.0, %v3191
      %v3193 = vpop.f32.mrb[0].mxu0
      %v3194 = vpop.f32.mrb[0].mxu0
      %v3195 = vadd.f32 0.0, %v3194
      %v3196 = vpop.f32.mrb[0].mxu0
      %3197 = vmatprep.mubr.bf16.mxu0 0
      %3198 = vmatmul.mubr.bf16.gmra.mrb[0].mxu0 %v3069
      %v3199 = vpop.f32.mrb[0].mxu0
      %v3200 = vadd.f32 0.0, %v3199
      %v3201 = vpop.f32.mrb[0].mxu0
      %v3202 = vpop.f32.mrb[0].mxu0
      %v3203 = vadd.f32 0.0, %v3202
      %v3204 = vpop.f32.mrb[0].mxu0
      %3205 = vmatprep.mubr.bf16.mxu0 0
      %3206 = vmatmul.mubr.bf16.gmra.mrb[0].mxu0 %v3071
      %v3207 = vpop.f32.mrb[0].mxu0
      %v3208 = vadd.f32 0.0, %v3207
      %v3209 = vpop.f32.mrb[0].mxu0
      %v3210 = vpop.f32.mrb[0].mxu0
      %v3211 = vadd.f32 0.0, %v3210
      %v3212 = vpop.f32.mrb[0].mxu0
      %3213 = vmatprep.mubr.bf16.mxu0 0
      %3214 = vmatmul.mubr.bf16.gmra.mrb[0].mxu0 %v3073
      %v3215 = vpop.f32.mrb[0].mxu0
      %v3216 = vadd.f32 0.0, %v3215
      %v3217 = vpop.f32.mrb[0].mxu0
      %v3218 = vpop.f32.mrb[0].mxu0
      %v3219 = vadd.f32 0.0, %v3218
      %v3220 = vpop.f32.mrb[0].mxu0
      %3221 = vmatprep.mubr.bf16.mxu0 0
      %3222 = vmatmul.mubr.bf16.gmra.mrb[0].mxu0 %v3075
      %v3223 = vpop.f32.mrb[0].mxu0
      %v3224 = vadd.f32 0.0, %v3223
      %v3225 = vpop.f32.mrb[0].mxu0
      %v3226 = vpop.f32.mrb[0].mxu0
      %v3227 = vadd.f32 0.0, %v3226
      %v3228 = vpop.f32.mrb[0].mxu0
      %3229 = vmatprep.mubr.bf16.mxu0 0
      %3230 = vmatmul.mubr.bf16.gmra.mrb[0].mxu0 %v3077
      %v3231 = vpop.f32.mrb[0].mxu0
      %v3232 = vadd.f32 0.0, %v3231
      %v3233 = vpop.f32.mrb[0].mxu0
      %v3234 = vpop.f32.mrb[0].mxu0
      %v3235 = vadd.f32 0.0, %v3234
      %v3236 = vpop.f32.mrb[0].mxu0
      %3237 = vmatprep.mubr.bf16.mxu0 0
      %3238 = vmatmul.mubr.bf16.gmra.mrb[0].mxu0 %v3079
      %v3239 = vpop.f32.mrb[0].mxu0
      %v3240 = vadd.f32 0.0, %v3239
      %v3241 = vpop.f32.mrb[0].mxu0
      %v3242 = vpop.f32.mrb[0].mxu0
      %v3243 = vadd.f32 0.0, %v3242
      %v3244 = vpop.f32.mrb[0].mxu0
      %3245 = vdwg.mxu0
      %v3246 = vpack.c.bf16 %v3123, %v3120
      %v3247 = vpack.c.bf16 %v3131, %v3128
      %v3248 = vpack.c.bf16 %v3139, %v3136
      %v3249 = vpack.c.bf16 %v3147, %v3144
      %v3250 = vpack.c.bf16 %v3155, %v3152
      %v3251 = vpack.c.bf16 %v3163, %v3160
      %v3252 = vpack.c.bf16 %v3171, %v3168
      %v3253 = vpack.c.bf16 %v3179, %v3176
      %v3254 = vpack.c.bf16 %v3187, %v3184
      %v3255 = vpack.c.bf16 %v3195, %v3192
      %v3256 = vpack.c.bf16 %v3203, %v3200
      %v3257 = vpack.c.bf16 %v3211, %v3208
      %v3258 = vpack.c.bf16 %v3219, %v3216
      %v3259 = vpack.c.bf16 %v3227, %v3224
      %v3260 = vpack.c.bf16 %v3235, %v3232
      %v3261 = vpack.c.bf16 %v3243, %v3240
      %v3278 = vunpack.c.l.b16 %v3246
      %v3279 = vunpack.c.h.b16 %v3246
      %v3280 = vunpack.c.l.b16 %v3247
      %v3281 = vunpack.c.h.b16 %v3247
      %v3282 = vunpack.c.l.b16 %v3248
      %v3283 = vunpack.c.h.b16 %v3248
      %v3284 = vunpack.c.l.b16 %v3249
      %v3285 = vunpack.c.h.b16 %v3249
      %v3286 = vunpack.c.l.b16 %v3250
      %v3287 = vunpack.c.h.b16 %v3250
      %v3288 = vunpack.c.l.b16 %v3251
      %v3289 = vunpack.c.h.b16 %v3251
      %v3290 = vunpack.c.l.b16 %v3252
      %v3291 = vunpack.c.h.b16 %v3252
      %v3292 = vunpack.c.l.b16 %v3253
      %v3293 = vunpack.c.h.b16 %v3253
      %v3294 = vunpack.c.l.b16 %v3254
      %v3295 = vunpack.c.h.b16 %v3254
      %v3296 = vunpack.c.l.b16 %v3255
      %v3297 = vunpack.c.h.b16 %v3255
      %v3298 = vunpack.c.l.b16 %v3256
      %v3299 = vunpack.c.h.b16 %v3256
      %v3300 = vunpack.c.l.b16 %v3257
      %v3301 = vunpack.c.h.b16 %v3257
      %v3302 = vunpack.c.l.b16 %v3258
      %v3303 = vunpack.c.h.b16 %v3258
      %v3304 = vunpack.c.l.b16 %v3259
      %v3305 = vunpack.c.h.b16 %v3259
      %v3306 = vunpack.c.l.b16 %v3260
      %v3307 = vunpack.c.h.b16 %v3260
      %v3308 = vunpack.c.l.b16 %v3261
      %v3309 = vunpack.c.h.b16 %v3261
      %v3310 = vpack.c.b16 %v3278, %v3278
      %v3311 = vpack.c.b16 %v3279, %v3279
      %v3312 = vpack.c.b16 %v3280, %v3280
      %v3313 = vpack.c.b16 %v3281, %v3281
      %v3314 = vpack.c.b16 %v3282, %v3282
      %v3315 = vpack.c.b16 %v3283, %v3283
      %v3316 = vpack.c.b16 %v3284, %v3284
      %v3317 = vpack.c.b16 %v3285, %v3285
      %v3318 = vpack.c.b16 %v3286, %v3286
      %v3319 = vpack.c.b16 %v3287, %v3287
      %v3320 = vpack.c.b16 %v3288, %v3288
      %v3321 = vpack.c.b16 %v3289, %v3289
      %v3322 = vpack.c.b16 %v3290, %v3290
      %v3323 = vpack.c.b16 %v3291, %v3291
      %v3324 = vpack.c.b16 %v3292, %v3292
      %v3325 = vpack.c.b16 %v3293, %v3293
      %v3326 = vpack.c.b16 %v3294, %v3294
      %v3327 = vpack.c.b16 %v3295, %v3295
      %v3328 = vpack.c.b16 %v3296, %v3296
      %v3329 = vpack.c.b16 %v3297, %v3297
      %v3330 = vpack.c.b16 %v3298, %v3298
      %v3331 = vpack.c.b16 %v3299, %v3299
      %v3332 = vpack.c.b16 %v3300, %v3300
      %v3333 = vpack.c.b16 %v3301, %v3301
      %v3334 = vpack.c.b16 %v3302, %v3302
      %v3335 = vpack.c.b16 %v3303, %v3303
      %v3336 = vpack.c.b16 %v3304, %v3304
      %v3337 = vpack.c.b16 %v3305, %v3305
      %v3338 = vpack.c.b16 %v3306, %v3306
      %v3339 = vpack.c.b16 %v3307, %v3307
      %v3340 = vpack.c.b16 %v3308, %v3308
      %v3341 = vpack.c.b16 %v3309, %v3309
      %vm3374 = vcmask 60416
      %3375 = vst.msk [vmem:[%s167] sm:$0xf] %vm3374, %v3310
      %3376 = vst.msk [vmem:[%s167 + $0x4] sm:$0xf] %vm3374, %v3311
      %3377 = vst.msk [vmem:[%s167 + $0x8] sm:$0xf] %vm3374, %v3312
      %3378 = vst.msk [vmem:[%s167 + $0xc] sm:$0xf] %vm3374, %v3313
      %3379 = vst.msk [vmem:[%s167 + $0x10] sm:$0xf] %vm3374, %v3314
      %3380 = vst.msk [vmem:[%s167 + $0x14] sm:$0xf] %vm3374, %v3315
      %3381 = vst.msk [vmem:[%s167 + $0x18] sm:$0xf] %vm3374, %v3316
      %3382 = vst.msk [vmem:[%s167 + $0x1c] sm:$0xf] %vm3374, %v3317
      %3383 = vst.msk [vmem:[%s167 + $0x20] sm:$0xf] %vm3374, %v3318
      %3384 = vst.msk [vmem:[%s167 + $0x24] sm:$0xf] %vm3374, %v3319
      %3385 = vst.msk [vmem:[%s167 + $0x28] sm:$0xf] %vm3374, %v3320
      %3386 = vst.msk [vmem:[%s167 + $0x2c] sm:$0xf] %vm3374, %v3321
      %3387 = vst.msk [vmem:[%s167 + $0x30] sm:$0xf] %vm3374, %v3322
      %3388 = vst.msk [vmem:[%s167 + $0x34] sm:$0xf] %vm3374, %v3323
      %3389 = vst.msk [vmem:[%s167 + $0x38] sm:$0xf] %vm3374, %v3324
      %3390 = vst.msk [vmem:[%s167 + $0x3c] sm:$0xf] %vm3374, %v3325
      %3391 = vst.msk [vmem:[%s167 + $0x40] sm:$0xf] %vm3374, %v3326
      %3392 = vst.msk [vmem:[%s167 + $0x44] sm:$0xf] %vm3374, %v3327
      %3393 = vst.msk [vmem:[%s167 + $0x48] sm:$0xf] %vm3374, %v3328
      %3394 = vst.msk [vmem:[%s167 + $0x4c] sm:$0xf] %vm3374, %v3329
      %3395 = vst.msk [vmem:[%s167 + $0x50] sm:$0xf] %vm3374, %v3330
      %3396 = vst.msk [vmem:[%s167 + $0x54] sm:$0xf] %vm3374, %v3331
      %3397 = vst.msk [vmem:[%s167 + $0x58] sm:$0xf] %vm3374, %v3332
      %3398 = vst.msk [vmem:[%s167 + $0x5c] sm:$0xf] %vm3374, %v3333
      %3399 = vst.msk [vmem:[%s167 + $0x60] sm:$0xf] %vm3374, %v3334
      %3400 = vst.msk [vmem:[%s167 + $0x64] sm:$0xf] %vm3374, %v3335
      %3401 = vst.msk [vmem:[%s167 + $0x68] sm:$0xf] %vm3374, %v3336
      %3402 = vst.msk [vmem:[%s167 + $0x6c] sm:$0xf] %vm3374, %v3337
      %3403 = vst.msk [vmem:[%s167 + $0x70] sm:$0xf] %vm3374, %v3338
      %3404 = vst.msk [vmem:[%s167 + $0x74] sm:$0xf] %vm3374, %v3339
      %3405 = vst.msk [vmem:[%s167 + $0x78] sm:$0xf] %vm3374, %v3340
      %3406 = vst.msk [vmem:[%s167 + $0x7c] sm:$0xf] %vm3374, %v3341
      %s3407 = smul.u32 16, %s18
      %p3408 = scmp.lt.s32.totalorder %s17, 1
      %s3409 = scalar_select %p3408, %s17, 1
      %p3410 = scmp.lt.s32.totalorder %s3407, 15
      %s3411 = scalar_select %p3410, %s3407, 15
      %s3412 = smul.addr %s3411, 2
      %s3413 = smul.addr %s3409, 32
      %s3414 = sadd.s32 %s3412, %s3413
      %s3415 = smul.addr %s3414, 4
      %s3416 = scalar_lea.vmem %s2, %s3415
      // Predicated region
      $region29: #{tpu_custom_call.1} parent=27 // pred_check
        %p3417 = pneg %p92
      $region30: #{tpu_custom_call.1} parent=27 // pred_check_branch
        %3419 = sbr.rel (%p3417) target = $region32
      $region31: #{tpu_custom_call.1} parent=27 // pred_region
        %s3420 = smul.u32 16, %s18
      $region32: #{tpu_custom_call.1} parent=27 // pred_fallthru
        _
    $region28: #{tpu_custom_call.1} parent=5 // pred_fallthru
      _
    %p3421 = scmp.le.s32.totalorder 2, %s8
    // Predicated region
    $region33: #{tpu_custom_call.1} parent=5 // pred_check
      %p3422 = pneg %p3421
    $region34: #{tpu_custom_call.1} parent=5 // pred_check_branch
      %3424 = sbr.rel (%p3422) target = $region36
    $region35: #{tpu_custom_call.1} parent=5 // pred_region
      %s3425 = ssub.s32 %s8, 2
      // Predicated region
      $region37: #{tpu_custom_call.1} parent=35 // pred_check
        %p3426 = pneg %p98
      $region38: #{tpu_custom_call.1} parent=35 // pred_check_branch
        %3428 = sbr.rel (%p3426) target = $region40
      $region39: #{tpu_custom_call.1} parent=35 // pred_region
        %s3429 = smul.u32 16, %s20
        %p3430 = scmp.lt.s32.totalorder %s19, 1
        %s3431 = scalar_select %p3430, %s19, 1
        %p3432 = scmp.lt.s32.totalorder %s3429, 15
        %s3433 = scalar_select %p3432, %s3429, 15
        %s3434 = smul.addr %s3433, 2
        %s3435 = smul.addr %s3431, 32
        %s3436 = sadd.s32 %s3434, %s3435
        %s3437 = smul.addr %s3436, 4
        %s3438 = scalar_lea.vmem %s2, %s3437
      $region40: #{tpu_custom_call.1} parent=35 // pred_fallthru
        _
    $region36: #{tpu_custom_call.1} parent=5 // pred_fallthru
      _
  $region6: #{tpu_custom_call.1} parent=0 // loop_footer
    %s12 = sadd.s32 1, %s8
  $region7: #{tpu_custom_call.1} parent=0 // loop_footer_branch
    %7 = sbr.rel target = $region3
  $region8: #{tpu_custom_call.1} parent=0 // loop_exit
    _

</llo_original>
